<compile_context>
chip_gen: v5e
topology: v5e:2x2
jax: 0.10.0
libtpu: 0.0.40
codegen_flags: <defaults>
</compile_context>

<pallas_src>
import collections
import functools
import math

import jax
import jax.numpy as jnp
from jax import lax
from jax.experimental import pallas as pl
from jax.experimental.pallas import tpu as pltpu

_EPS = 1e-5          # torch nn.LayerNorm default
_LANE = 128          # lane width / MXU column alignment
_TILE_ROWS = 512     # max rows per grid step; VMEM budget loop may shrink it


def _round_up(n, m):
    return ((n + m - 1) // m) * m


# ----------------------------- capability probes ----------------------------- #

@functools.lru_cache(maxsize=None)
def _single_buffer_weights_supported():
    """Probe pl.Buffered(1) support for constant-index (weight) BlockSpecs."""
    if not hasattr(pl, "Buffered"):
        return False
    try:
        def _copy(x_ref, o_ref):
            o_ref[...] = x_ref[...]
        y = pl.pallas_call(
            _copy,
            out_shape=jax.ShapeDtypeStruct((8, 128), jnp.float32),
            grid=(1,),
            in_specs=[pl.BlockSpec((8, 128), lambda i: (0, 0),
                                   pipeline_mode=pl.Buffered(1))],
            out_specs=pl.BlockSpec((8, 128), lambda i: (0, 0)),
        )(jnp.zeros((8, 128), jnp.float32))
        jax.block_until_ready(y)
        return True
    except Exception:
        return False


@functools.lru_cache(maxsize=None)
def _vmem_budget_bytes():
    try:
        cap = int(pltpu.get_tpu_info().vmem_capacity_bytes)
    except Exception:
        cap = 64 * 1024 * 1024          # conservative fallback (v7x physical)
    return int(cap * 0.85)               # leave headroom for the compiler


# ------------------------------ Pallas kernel ------------------------------- #

def _make_tide_chain_kernel(num_blocks, dreals, mxu_dtype):
    """Fused chain of TideBlocks.

    Per block refs (in order): W1s=[Din(_p), H_p+Dout_p] (bf16),
    b1s=[1, H_p+Dout_p], W2=[H_p, Dout_p] (bf16), b2/gamma/beta=[1, Dout_p].
    Padded weight/bias/gamma/beta lanes are zero, so padded lanes of every
    block's output are exactly zero; LayerNorm stats only need the analytic
    1/d_real correction.
    """
    def kernel(*refs):
        x_ref, o_ref = refs[0], refs[-1]
        w_refs = refs[1:-1]
        x = x_ref[...].astype(jnp.float32)
        for i in range(num_blocks):
            w1s, b1s, w2, b2, g, bt = w_refs[6 * i: 6 * i + 6]
            h_pad = w2.shape[0]
            d_real = dreals[i]
            # one wide bf16 MXU matmul for both the dense and the skip branch
            xw = jnp.dot(x.astype(mxu_dtype), w1s[...],
                         preferred_element_type=jnp.float32) + b1s[...]
            h = jnp.maximum(xw[:, :h_pad], 0.0)          # ReLU (dense branch, f32)
            s = xw[:, h_pad:]                            # skip branch (f32)
            y = jnp.dot(h.astype(mxu_dtype), w2[...],
                        preferred_element_type=jnp.float32) + b2[...] + s
            # Dropout: identity (inference).
            # LayerNorm over the REAL d_real features; padded lanes of y are 0.
            inv_d = 1.0 / float(d_real)
            mean = jnp.sum(y, axis=-1, keepdims=True) * inv_d
            msq = jnp.sum(y * y, axis=-1, keepdims=True) * inv_d
            var = jnp.maximum(msq - mean * mean, 0.0)
            # gamma/beta padding lanes are zero -> padded output lanes stay zero.
            x = (y - mean) * (lax.rsqrt(var + _EPS) * g[...]) + bt[...]
        o_ref[...] = x.astype(o_ref.dtype)
    return kernel


def _chain_footprint_bytes(tile, d_in, blocks, weight_buffers):
    wbytes = sum(int(v.size) * v.dtype.itemsize
                 for blk in blocks for v in blk.values()) * weight_buffers
    dout_pad = blocks[-1]["W2"].shape[1]
    max_w = max(max(blk["W1s"].shape[1], blk["W2"].shape[1]) for blk in blocks)
    act = 2 * tile * d_in * 4 + 2 * tile * dout_pad * 4   # double-buffered tiles
    tmp = 4 * tile * max_w * 4                            # in-kernel temporaries
    return wbytes + act + tmp


def tide_chain(x2d, blocks, dreals, *, max_tile_rows=_TILE_ROWS):
    """Apply a fused chain of TideBlocks row-wise.  x2d: [N, Din_real]."""
    n, d_in = x2d.shape
    assert blocks[0]["W1s"].shape[0] == d_in
    dout_pad = blocks[-1]["W2"].shape[1]
    dout_real = dreals[-1]

    single_buf = _single_buffer_weights_supported()
    weight_buffers = 1 if single_buf else 2
    budget = _vmem_budget_bytes()

    # Balanced row tiles; >=2 grid steps when there is enough work so the
    # "parallel" grid axis can shard across both TensorCores on v7x.
    num_tiles = max(pl.cdiv(n, max_tile_rows), 2 if n > 8 else 1)
    tile = _round_up(pl.cdiv(n, num_tiles), 8)
    while tile > 8 and _chain_footprint_bytes(tile, d_in, blocks,
                                              weight_buffers) > budget:
        tile = _round_up(max(tile // 2, 8), 8)
    # TODO(synk): K-tile an oversized first-block W1s (extra 'arbitrary' grid
    # axis + f32 accumulator) instead of shrinking `tile` for production-sized
    # encoder_input_dim that still exceeds the VMEM budget.

    # No row-pad HBM copy: cdiv grid, trailing block may run past the end (rows
    # are independent; OOB writes are masked).  Only pad when the whole array is
    # smaller than one tile.
    if n < tile:
        x2d = jnp.pad(x2d, ((0, tile - n), (0, 0)))
    n_rows = max(n, tile)
    grid = (pl.cdiv(n_rows, tile),)

    kernel = _make_tide_chain_kernel(len(blocks), tuple(dreals),
                                     blocks[0]["W1s"].dtype)

    def _weight_spec(shape):
        # constant index_map -> weights stay VMEM-resident across the grid;
        # single-buffer them (double buffering a never-changing block is waste).
        if single_buf:
            return pl.BlockSpec(shape, lambda i: (0, 0),
                                pipeline_mode=pl.Buffered(1))
        return pl.BlockSpec(shape, lambda i: (0, 0))

    in_specs = [pl.BlockSpec((tile, d_in), lambda i: (i, 0))]
    weight_inputs = []
    flops = 0
    weight_bytes = 0
    for blk in blocks:
        for name in ("W1s", "b1s", "W2", "b2", "gamma", "beta"):
            w = blk[name]
            weight_inputs.append(w)
            in_specs.append(_weight_spec(w.shape))
            weight_bytes += int(w.size) * w.dtype.itemsize
        k, hw = blk["W1s"].shape
        hp, dp = blk["W2"].shape
        flops += 2 * n_rows * (k * hw + hp * dp)

    footprint = _chain_footprint_bytes(tile, d_in, blocks, weight_buffers)
    vmem_limit = int(min(budget, max(32 * 1024 * 1024,
                                     footprint * 5 // 4 + (2 << 20))))
    cost = pl.CostEstimate(
        flops=int(flops),
        transcendentals=int(n_rows * len(blocks)),
        bytes_accessed=int(n_rows * (d_in + dout_pad) * 4 + weight_bytes))

    out = pl.pallas_call(
        kernel,
        out_shape=jax.ShapeDtypeStruct((n_rows, dout_pad), jnp.float32),
        grid=grid,
        in_specs=in_specs,
        out_specs=pl.BlockSpec((tile, dout_pad), lambda i: (i, 0)),
        compiler_params=pltpu.CompilerParams(
            dimension_semantics=("parallel",),      # megacore sharding on v7x
            vmem_limit_bytes=vmem_limit),
        cost_estimate=cost,
    )(x2d, *weight_inputs)
    # TODO(synk): fold the padded-lane layout into the next chain's first-block
    # weight rows to skip this slice + the reshape/concat HBM pass entirely.
    return out[:n, :dout_real]


# --------------------------- Parameter construction ------------------------- #

def _init_linear(key, fan_in, fan_out):
    """Mimics torch.nn.Linear default init (uniform +-1/sqrt(fan_in))."""
    k1, k2 = jax.random.split(key)
    bound = 1.0 / math.sqrt(fan_in)
    W = jax.random.uniform(k1, (fan_in, fan_out), jnp.float32, -bound, bound)
    b = jax.random.uniform(k2, (1, fan_out), jnp.float32, -bound, bound)
    return W, b


def _get_h_dim(din, dout, hidden):
    if hidden != 0:
        return hidden
    return int(round(2.0 ** (math.log2(din) / 2.0 + math.log2(dout) / 2.0)))


def _init_tide_block(key, din, dout, h):
    k1, k2, k3 = jax.random.split(key, 3)
    W1, b1 = _init_linear(k1, din, h)
    W2, b2 = _init_linear(k2, h, dout)
    Ws, bs = _init_linear(k3, din, dout)
    return {"W1": W1, "b1": b1, "W2": W2, "b2": b2, "Ws": Ws, "bs": bs,
            "gamma": jnp.ones((1, dout), jnp.float32),
            "beta": jnp.zeros((1, dout), jnp.float32)}


def _pad2(a, rows, cols):
    return jnp.zeros((rows, cols), a.dtype).at[:a.shape[0], :a.shape[1]].set(a)


def _pad_block(raw, din, h, dout, *, pad_input_rows, weight_dtype=jnp.bfloat16):
    """Zero-pad a raw TideBlock to lane-dense (multiples of 128) output widths,
    merge the shared-LHS weights W1|Ws (and biases b1|bs), cast matmul weights to
    bf16.  The first block of a chain keeps its real (unpadded) input rows so the
    HBM input needs no pad copy."""
    din_rows = _round_up(din, _LANE) if pad_input_rows else din
    h_p, dout_p = _round_up(h, _LANE), _round_up(dout, _LANE)
    W1s = jnp.concatenate([_pad2(raw["W1"], din_rows, h_p),
                           _pad2(raw["Ws"], din_rows, dout_p)], axis=1)
    b1s = jnp.concatenate([_pad2(raw["b1"], 1, h_p),
                           _pad2(raw["bs"], 1, dout_p)], axis=1)
    return {"W1s": W1s.astype(weight_dtype), "b1s": b1s,
            "W2": _pad2(raw["W2"], h_p, dout_p).astype(weight_dtype),
            "b2": _pad2(raw["b2"], 1, dout_p),
            "gamma": _pad2(raw["gamma"], 1, dout_p),   # pad lanes -> 0
            "beta": _pad2(raw["beta"], 1, dout_p)}


StaticCfg = collections.namedtuple(
    "StaticCfg", ["seq_len", "pred_len", "proj_dreals", "enc_dreals"])


def build_contactin_encoder(key, *, seq_len, pred_len, lookback_dim,
                            covariate_dimr, attrib_dimr,
                            encoder_output_dim, encoder_intmlp_dims,
                            encoder_hidden_dims=(),
                            projector_output_dim=0, projector_hidden_dim=0):
    # The reference applies nn.Linear(seq_len, pred_len) to `lookback`, which
    # only type-checks when lookback_dim == seq_len.
    assert lookback_dim == seq_len, "residual path requires lookback_dim == seq_len"

    encoder_input_dim = (seq_len + (seq_len + pred_len) * covariate_dimr
                         + attrib_dimr) * lookback_dim
    projector_input_dim = covariate_dimr * lookback_dim

    all_dims = [encoder_input_dim] + list(encoder_intmlp_dims) + [encoder_output_dim]
    keys = jax.random.split(key, len(all_dims) + 2)

    def bh(i):
        hd = encoder_hidden_dims
        if not hasattr(hd, "__iter__"):
            return hd
        return hd[i] if len(hd) > 0 else 0

    raw_encoder, enc_blocks, enc_dreals = [], [], []
    for i in range(1, len(all_dims)):
        din, dout = all_dims[i - 1], all_dims[i]
        h = _get_h_dim(din, dout, bh(i))
        raw = _init_tide_block(keys[i], din, dout, h)
        raw_encoder.append(raw)
        enc_blocks.append(_pad_block(raw, din, h, dout, pad_input_rows=(i > 1)))
        enc_dreals.append(dout)

    h_proj = _get_h_dim(projector_input_dim, projector_output_dim, projector_hidden_dim)
    raw_proj = _init_tide_block(keys[-2], projector_input_dim,
                                projector_output_dim, h_proj)
    proj_blocks = [_pad_block(raw_proj, projector_input_dim, h_proj,
                              projector_output_dim, pad_input_rows=False)]

    Wr, br = _init_linear(keys[-1], seq_len, pred_len)

    params = {"projector": proj_blocks, "encoder": enc_blocks,
              "residuar_W": Wr, "residuar_b": br}
    raw_params = {"projector": raw_proj, "encoder": raw_encoder,
                  "residuar_W": Wr, "residuar_b": br}
    cfg = StaticCfg(seq_len=seq_len, pred_len=pred_len,
                    proj_dreals=(projector_output_dim,),
                    enc_dreals=tuple(enc_dreals))
    return params, raw_params, cfg


# --------------------------------- Forward ---------------------------------- #

def _forward_impl(params, cfg, lookback, covariate, attrib):
    """
    lookback : [B, seq_len, lookback_dim]
    covariate: [B, seq_len+pred_len, lookback_dim*covariate_dimr]
    attrib   : [B, 1, lookback_dim*attrib_dimr]
    returns  : (e, covariate_future, residual)
    """
    B, L, Cc = covariate.shape
    # projector (single fused TideBlock) applied along the last axis, row-tiled
    cov_all = tide_chain(covariate.reshape(B * L, Cc),
                         params["projector"], cfg.proj_dreals)
    cov_all = cov_all.reshape(B, L, cfg.proj_dreals[-1])
    covariate_future = cov_all[:, cfg.seq_len:, :]

    # flatten + concat ('b l n -> b (l n)' == row-major reshape); revin=None -> no-op
    concated = jnp.concatenate(
        [lookback.reshape(B, -1), cov_all.reshape(B, -1), attrib.reshape(B, -1)],
        axis=1)

    # dense encoder: whole TideBlock chain fused into ONE pallas_call
    e = tide_chain(concated, params["encoder"], cfg.enc_dreals)

    # residual path: tiny Linear(seq_len -> pred_len) on `lookback` (as in the
    # reference; requires lookback_dim == seq_len).  Plain XLA — not worth a
    # custom call.
    res_tp = lookback @ params["residuar_W"] + params["residuar_b"]
    residual = jnp.transpose(res_tp, (0, 2, 1))    # 'b n h -> b h n'
    return e, covariate_future, residual


contactin_encoder_forward = jax.jit(_forward_impl, static_argnums=(1,))


# ------------------------------ Pure-JAX reference --------------------------- #

def _ref_tide_block(x, p):
    h = jnp.maximum(x @ p["W1"] + p["b1"], 0.0)
    y = (h @ p["W2"] + p["b2"]) + (x @ p["Ws"] + p["bs"])
    mean = jnp.mean(y, axis=-1, keepdims=True)
    var = jnp.mean((y - mean) ** 2, axis=-1, keepdims=True)
    return (y - mean) / jnp.sqrt(var + _EPS) * p["gamma"] + p["beta"]


def _ref_forward(raw_params, lookback, covariate, attrib, *, seq_len, pred_len):
    B, L, Cc = covariate.shape
    cov_all = _ref_tide_block(covariate.reshape(B * L, Cc),
                              raw_params["projector"]).reshape(B, L, -1)
    covariate_future = cov_all[:, seq_len:, :]
    concated = jnp.concatenate([lookback.reshape(B, -1), cov_all.reshape(B, -1),
                                attrib.reshape(B, -1)], axis=1)
    e = concated
    for blk in raw_params["encoder"]:
        e = _ref_tide_block(e, blk)
    res_tp = lookback @ raw_params["residuar_W"] + raw_params["residuar_b"]
    residual = jnp.transpose(res_tp, (0, 2, 1))
    return e, covariate_future, residual


# ----------------------------------- Main ------------------------------------ #

if __name__ == "__main__":
    # Small, consistent shapes (lookback_dim == seq_len per the residual-path note).
    B = 2
    seq_len, pred_len = 8, 4
    lookback_dim = 8
    covariate_dimr, attrib_dimr = 2, 3
    encoder_output_dim = 32
    encoder_intmlp_dims = [64]
    projector_output_dim = covariate_dimr * lookback_dim  # keeps encoder width consistent

    key = jax.random.PRNGKey(0)
    kp, kl, kc, ka = jax.random.split(key, 4)

    params, raw_params, cfg = build_contactin_encoder(
        kp, seq_len=seq_len, pred_len=pred_len, lookback_dim=lookback_dim,
        covariate_dimr=covariate_dimr, attrib_dimr=attrib_dimr,
        encoder_output_dim=encoder_output_dim,
        encoder_intmlp_dims=encoder_intmlp_dims,
        encoder_hidden_dims=[],
        projector_output_dim=projector_output_dim,
        projector_hidden_dim=0)

    lookback = jax.random.normal(kl, (B, seq_len, lookback_dim), jnp.float32)
    covariate = jax.random.normal(
        kc, (B, seq_len + pred_len, lookback_dim * covariate_dimr), jnp.float32)
    attrib = jax.random.normal(ka, (B, 1, lookback_dim * attrib_dimr), jnp.float32)

    e, cov_future, residual = contactin_encoder_forward(
        params, cfg, lookback, covariate, attrib)
    jax.block_until_ready((e, cov_future, residual))

    # sanity-check against pure-JAX f32 reference (bf16 MXU operands -> loose tol)
    e_r, cf_r, res_r = _ref_forward(raw_params, lookback, covariate, attrib,
                                    seq_len=seq_len, pred_len=pred_len)
    assert e.shape == (B, encoder_output_dim)
    assert cov_future.shape == (B, pred_len, projector_output_dim)
    assert residual.shape == (B, pred_len, seq_len)
    assert jnp.allclose(e, e_r, atol=5e-2, rtol=5e-2)
    assert jnp.allclose(cov_future, cf_r, atol=5e-2, rtol=5e-2)
    assert jnp.allclose(residual, res_r, atol=1e-4, rtol=1e-4)

    print("KERNEL_OK")
</pallas_src>

<mosaic_0001>
module attributes {stable_mosaic.version = 11 : i64} {
  func.func @kernel(%arg0: i32, %arg1: memref<16x16xf32, #tpu.memory_space<vmem>>, %arg2: memref<16x256xbf16, #tpu.memory_space<vmem>>, %arg3: memref<1x256xf32, #tpu.memory_space<vmem>>, %arg4: memref<128x128xbf16, #tpu.memory_space<vmem>>, %arg5: memref<1x128xf32, #tpu.memory_space<vmem>>, %arg6: memref<1x128xf32, #tpu.memory_space<vmem>>, %arg7: memref<1x128xf32, #tpu.memory_space<vmem>>, %arg8: memref<16x128xf32, #tpu.memory_space<vmem>>) attributes {dimension_semantics = [#tpu.dimension_semantics<parallel>], iteration_bounds = array<i64: 2>, scalar_prefetch = 0 : i64, scratch_operands = 0 : i64, tpu.core_type = #tpu.core_type<tc>, window_params = [{transform_indices = @transform_0, window_bounds = array<i64: 16, 16>}, {pipeline_mode = #tpu.pipeline_mode<synchronous>, transform_indices = @transform_1, window_bounds = array<i64: 16, 256>}, {pipeline_mode = #tpu.pipeline_mode<synchronous>, transform_indices = @transform_2, window_bounds = array<i64: 1, 256>}, {pipeline_mode = #tpu.pipeline_mode<synchronous>, transform_indices = @transform_3, window_bounds = array<i64: 128, 128>}, {pipeline_mode = #tpu.pipeline_mode<synchronous>, transform_indices = @transform_4, window_bounds = array<i64: 1, 128>}, {pipeline_mode = #tpu.pipeline_mode<synchronous>, transform_indices = @transform_5, window_bounds = array<i64: 1, 128>}, {pipeline_mode = #tpu.pipeline_mode<synchronous>, transform_indices = @transform_6, window_bounds = array<i64: 1, 128>}, {transform_indices = @transform_7, window_bounds = array<i64: 16, 128>}]} {
    %c0 = arith.constant 0 : index
    %c0_0 = arith.constant 0 : index
    %0 = vector.load %arg1[%c0, %c0_0] : memref<16x16xf32, #tpu.memory_space<vmem>>, vector<16x16xf32>
    %1 = arith.truncf %0 : vector<16x16xf32> to vector<16x16xbf16>
    %c0_1 = arith.constant 0 : index
    %c0_2 = arith.constant 0 : index
    %2 = vector.load %arg2[%c0_1, %c0_2] : memref<16x256xbf16, #tpu.memory_space<vmem>>, vector<16x256xbf16>
    %cst = arith.constant dense<0.000000e+00> : vector<16x256xf32>
    %3 = tpu.matmul %1, %2, %cst {dimension_numbers = #tpu.dot_dimension_numbers<[1], [0], [0], [1], [0, 0, 1, 1], [], []>} : vector<16x16xbf16>, vector<16x256xbf16>, vector<16x256xf32> -> vector<16x256xf32>
    %c0_3 = arith.constant 0 : index
    %c0_4 = arith.constant 0 : index
    %4 = vector.load %arg3[%c0_3, %c0_4] : memref<1x256xf32, #tpu.memory_space<vmem>>, vector<1x256xf32>
    %5 = vector.broadcast %4 : vector<1x256xf32> to vector<16x256xf32>
    %6 = arith.addf %3, %5 : vector<16x256xf32>
    %7 = vector.extract_strided_slice %6 {offsets = [0, 0], sizes = [16, 128], strides = [1, 1]} : vector<16x256xf32> to vector<16x128xf32>
    %cst_5 = arith.constant 0.000000e+00 : f32
    %8 = vector.broadcast %cst_5 : f32 to vector<16x128xf32>
    %9 = arith.maximumf %7, %8 : vector<16x128xf32>
    %10 = vector.extract_strided_slice %6 {offsets = [0, 128], sizes = [16, 128], strides = [1, 1]} : vector<16x256xf32> to vector<16x128xf32>
    %11 = arith.truncf %9 : vector<16x128xf32> to vector<16x128xbf16>
    %c0_6 = arith.constant 0 : index
    %c0_7 = arith.constant 0 : index
    %12 = vector.load %arg4[%c0_6, %c0_7] : memref<128x128xbf16, #tpu.memory_space<vmem>>, vector<128x128xbf16>
    %cst_8 = arith.constant dense<0.000000e+00> : vector<16x128xf32>
    %13 = tpu.matmul %11, %12, %cst_8 {dimension_numbers = #tpu.dot_dimension_numbers<[1], [0], [0], [1], [0, 0, 1, 1], [], []>} : vector<16x128xbf16>, vector<128x128xbf16>, vector<16x128xf32> -> vector<16x128xf32>
    %c0_9 = arith.constant 0 : index
    %c0_10 = arith.constant 0 : index
    %14 = vector.load %arg5[%c0_9, %c0_10] : memref<1x128xf32, #tpu.memory_space<vmem>>, vector<1x128xf32>
    %15 = vector.broadcast %14 : vector<1x128xf32> to vector<16x128xf32>
    %16 = arith.addf %13, %15 : vector<16x128xf32>
    %17 = arith.addf %16, %10 : vector<16x128xf32>
    %cst_11 = arith.constant dense<0.000000e+00> : vector<16xf32>
    %18 = vector.multi_reduction <add>, %17, %cst_11 [1] : vector<16x128xf32> to vector<16xf32>
    %19 = vector.shape_cast %18 : vector<16xf32> to vector<16x1xf32>
    %cst_12 = arith.constant 6.250000e-02 : f32
    %20 = vector.broadcast %cst_12 : f32 to vector<16x1xf32>
    %21 = arith.mulf %19, %20 : vector<16x1xf32>
    %22 = arith.mulf %17, %17 : vector<16x128xf32>
    %cst_13 = arith.constant dense<0.000000e+00> : vector<16xf32>
    %23 = vector.multi_reduction <add>, %22, %cst_13 [1] : vector<16x128xf32> to vector<16xf32>
    %24 = vector.shape_cast %23 : vector<16xf32> to vector<16x1xf32>
    %cst_14 = arith.constant 6.250000e-02 : f32
    %25 = vector.broadcast %cst_14 : f32 to vector<16x1xf32>
    %26 = arith.mulf %24, %25 : vector<16x1xf32>
    %27 = arith.mulf %21, %21 : vector<16x1xf32>
    %28 = arith.subf %26, %27 : vector<16x1xf32>
    %cst_15 = arith.constant 0.000000e+00 : f32
    %29 = vector.broadcast %cst_15 : f32 to vector<16x1xf32>
    %30 = arith.maximumf %28, %29 : vector<16x1xf32>
    %31 = vector.broadcast %21 : vector<16x1xf32> to vector<16x128xf32>
    %32 = arith.subf %17, %31 : vector<16x128xf32>
    %cst_16 = arith.constant 9.99999974E-6 : f32
    %33 = vector.broadcast %cst_16 : f32 to vector<16x1xf32>
    %34 = arith.addf %30, %33 : vector<16x1xf32>
    %35 = math.rsqrt %34 : vector<16x1xf32>
    %c0_17 = arith.constant 0 : index
    %c0_18 = arith.constant 0 : index
    %36 = vector.load %arg6[%c0_17, %c0_18] : memref<1x128xf32, #tpu.memory_space<vmem>>, vector<1x128xf32>
    %37 = vector.broadcast %35 : vector<16x1xf32> to vector<16x128xf32>
    %38 = vector.broadcast %36 : vector<1x128xf32> to vector<16x128xf32>
    %39 = arith.mulf %37, %38 : vector<16x128xf32>
    %40 = arith.mulf %32, %39 : vector<16x128xf32>
    %c0_19 = arith.constant 0 : index
    %c0_20 = arith.constant 0 : index
    %41 = vector.load %arg7[%c0_19, %c0_20] : memref<1x128xf32, #tpu.memory_space<vmem>>, vector<1x128xf32>
    %42 = vector.broadcast %41 : vector<1x128xf32> to vector<16x128xf32>
    %43 = arith.addf %40, %42 : vector<16x128xf32>
    %c0_21 = arith.constant 0 : index
    %c0_22 = arith.constant 0 : index
    %44 = vector.load %arg8[%c0_21, %c0_22] : memref<16x128xf32, #tpu.memory_space<vmem>>, vector<16x128xf32>
    tpu.vector_store %arg8[%c0_21, %c0_22], %43 {strides = array<i32>} : memref<16x128xf32, #tpu.memory_space<vmem>>, vector<16x128xf32>,
    return
  }
  func.func @transform_0(%arg0: i32) -> (i32, i32) {
    %c0_i32 = arith.constant 0 : i32
    %c0_i32_0 = arith.constant 0 : i32
    return %arg0, %c0_i32 : i32, i32
  }
  func.func @transform_1(%arg0: i32) -> (i32, i32) {
    %c0_i32 = arith.constant 0 : i32
    %c0_i32_0 = arith.constant 0 : i32
    %c0_i32_1 = arith.constant 0 : i32
    return %c0_i32, %c0_i32_0 : i32, i32
  }
  func.func @transform_2(%arg0: i32) -> (i32, i32) {
    %c0_i32 = arith.constant 0 : i32
    %c0_i32_0 = arith.constant 0 : i32
    %c0_i32_1 = arith.constant 0 : i32
    return %c0_i32, %c0_i32_0 : i32, i32
  }
  func.func @transform_3(%arg0: i32) -> (i32, i32) {
    %c0_i32 = arith.constant 0 : i32
    %c0_i32_0 = arith.constant 0 : i32
    %c0_i32_1 = arith.constant 0 : i32
    return %c0_i32, %c0_i32_0 : i32, i32
  }
  func.func @transform_4(%arg0: i32) -> (i32, i32) {
    %c0_i32 = arith.constant 0 : i32
    %c0_i32_0 = arith.constant 0 : i32
    %c0_i32_1 = arith.constant 0 : i32
    return %c0_i32, %c0_i32_0 : i32, i32
  }
  func.func @transform_5(%arg0: i32) -> (i32, i32) {
    %c0_i32 = arith.constant 0 : i32
    %c0_i32_0 = arith.constant 0 : i32
    %c0_i32_1 = arith.constant 0 : i32
    return %c0_i32, %c0_i32_0 : i32, i32
  }
  func.func @transform_6(%arg0: i32) -> (i32, i32) {
    %c0_i32 = arith.constant 0 : i32
    %c0_i32_0 = arith.constant 0 : i32
    %c0_i32_1 = arith.constant 0 : i32
    return %c0_i32, %c0_i32_0 : i32, i32
  }
  func.func @transform_7(%arg0: i32) -> (i32, i32) {
    %c0_i32 = arith.constant 0 : i32
    %c0_i32_0 = arith.constant 0 : i32
    return %arg0, %c0_i32 : i32, i32
  }
}

module attributes {stable_mosaic.version = 11 : i64} {
  func.func @kernel(%arg0: i32, %arg1: memref<8x280xf32, #tpu.memory_space<vmem>>, %arg2: memref<280x384xbf16, #tpu.memory_space<vmem>>, %arg3: memref<1x384xf32, #tpu.memory_space<vmem>>, %arg4: memref<256x128xbf16, #tpu.memory_space<vmem>>, %arg5: memref<1x128xf32, #tpu.memory_space<vmem>>, %arg6: memref<1x128xf32, #tpu.memory_space<vmem>>, %arg7: memref<1x128xf32, #tpu.memory_space<vmem>>, %arg8: memref<128x256xbf16, #tpu.memory_space<vmem>>, %arg9: memref<1x256xf32, #tpu.memory_space<vmem>>, %arg10: memref<128x128xbf16, #tpu.memory_space<vmem>>, %arg11: memref<1x128xf32, #tpu.memory_space<vmem>>, %arg12: memref<1x128xf32, #tpu.memory_space<vmem>>, %arg13: memref<1x128xf32, #tpu.memory_space<vmem>>, %arg14: memref<8x128xf32, #tpu.memory_space<vmem>>) attributes {dimension_semantics = [#tpu.dimension_semantics<parallel>], iteration_bounds = array<i64: 1>, scalar_prefetch = 0 : i64, scratch_operands = 0 : i64, tpu.core_type = #tpu.core_type<tc>, window_params = [{transform_indices = @transform_0, window_bounds = array<i64: 8, 280>}, {pipeline_mode = #tpu.pipeline_mode<synchronous>, transform_indices = @transform_1, window_bounds = array<i64: 280, 384>}, {pipeline_mode = #tpu.pipeline_mode<synchronous>, transform_indices = @transform_2, window_bounds = array<i64: 1, 384>}, {pipeline_mode = #tpu.pipeline_mode<synchronous>, transform_indices = @transform_3, window_bounds = array<i64: 256, 128>}, {pipeline_mode = #tpu.pipeline_mode<synchronous>, transform_indices = @transform_4, window_bounds = array<i64: 1, 128>}, {pipeline_mode = #tpu.pipeline_mode<synchronous>, transform_indices = @transform_5, window_bounds = array<i64: 1, 128>}, {pipeline_mode = #tpu.pipeline_mode<synchronous>, transform_indices = @transform_6, window_bounds = array<i64: 1, 128>}, {pipeline_mode = #tpu.pipeline_mode<synchronous>, transform_indices = @transform_7, window_bounds = array<i64: 128, 256>}, {pipeline_mode = #tpu.pipeline_mode<synchronous>, transform_indices = @transform_8, window_bounds = array<i64: 1, 256>}, {pipeline_mode = #tpu.pipeline_mode<synchronous>, transform_indices = @transform_9, window_bounds = array<i64: 128, 128>}, {pipeline_mode = #tpu.pipeline_mode<synchronous>, transform_indices = @transform_10, window_bounds = array<i64: 1, 128>}, {pipeline_mode = #tpu.pipeline_mode<synchronous>, transform_indices = @transform_11, window_bounds = array<i64: 1, 128>}, {pipeline_mode = #tpu.pipeline_mode<synchronous>, transform_indices = @transform_12, window_bounds = array<i64: 1, 128>}, {transform_indices = @transform_13, window_bounds = array<i64: 8, 128>}]} {
    %c0 = arith.constant 0 : index
    %c0_0 = arith.constant 0 : index
    %0 = vector.load %arg1[%c0, %c0_0] : memref<8x280xf32, #tpu.memory_space<vmem>>, vector<8x280xf32>
    %1 = arith.truncf %0 : vector<8x280xf32> to vector<8x280xbf16>
    %c0_1 = arith.constant 0 : index
    %c0_2 = arith.constant 0 : index
    %2 = vector.load %arg2[%c0_1, %c0_2] : memref<280x384xbf16, #tpu.memory_space<vmem>>, vector<280x384xbf16>
    %cst = arith.constant dense<0.000000e+00> : vector<8x384xf32>
    %3 = tpu.matmul %1, %2, %cst {dimension_numbers = #tpu.dot_dimension_numbers<[1], [0], [0], [1], [0, 0, 1, 1], [], []>} : vector<8x280xbf16>, vector<280x384xbf16>, vector<8x384xf32> -> vector<8x384xf32>
    %c0_3 = arith.constant 0 : index
    %c0_4 = arith.constant 0 : index
    %4 = vector.load %arg3[%c0_3, %c0_4] : memref<1x384xf32, #tpu.memory_space<vmem>>, vector<1x384xf32>
    %5 = vector.broadcast %4 : vector<1x384xf32> to vector<8x384xf32>
    %6 = arith.addf %3, %5 : vector<8x384xf32>
    %7 = vector.extract_strided_slice %6 {offsets = [0, 0], sizes = [8, 256], strides = [1, 1]} : vector<8x384xf32> to vector<8x256xf32>
    %cst_5 = arith.constant 0.000000e+00 : f32
    %8 = vector.broadcast %cst_5 : f32 to vector<8x256xf32>
    %9 = arith.maximumf %7, %8 : vector<8x256xf32>
    %10 = vector.extract_strided_slice %6 {offsets = [0, 256], sizes = [8, 128], strides = [1, 1]} : vector<8x384xf32> to vector<8x128xf32>
    %11 = arith.truncf %9 : vector<8x256xf32> to vector<8x256xbf16>
    %c0_6 = arith.constant 0 : index
    %c0_7 = arith.constant 0 : index
    %12 = vector.load %arg4[%c0_6, %c0_7] : memref<256x128xbf16, #tpu.memory_space<vmem>>, vector<256x128xbf16>
    %cst_8 = arith.constant dense<0.000000e+00> : vector<8x128xf32>
    %13 = tpu.matmul %11, %12, %cst_8 {dimension_numbers = #tpu.dot_dimension_numbers<[1], [0], [0], [1], [0, 0, 1, 1], [], []>} : vector<8x256xbf16>, vector<256x128xbf16>, vector<8x128xf32> -> vector<8x128xf32>
    %c0_9 = arith.constant 0 : index
    %c0_10 = arith.constant 0 : index
    %14 = vector.load %arg5[%c0_9, %c0_10] : memref<1x128xf32, #tpu.memory_space<vmem>>, vector<1x128xf32>
    %15 = vector.broadcast %14 : vector<1x128xf32> to vector<8x128xf32>
    %16 = arith.addf %13, %15 : vector<8x128xf32>
    %17 = arith.addf %16, %10 : vector<8x128xf32>
    %cst_11 = arith.constant dense<0.000000e+00> : vector<8xf32>
    %18 = vector.multi_reduction <add>, %17, %cst_11 [1] : vector<8x128xf32> to vector<8xf32>
    %19 = vector.shape_cast %18 : vector<8xf32> to vector<8x1xf32>
    %cst_12 = arith.constant 1.562500e-02 : f32
    %20 = vector.broadcast %cst_12 : f32 to vector<8x1xf32>
    %21 = arith.mulf %19, %20 : vector<8x1xf32>
    %22 = arith.mulf %17, %17 : vector<8x128xf32>
    %cst_13 = arith.constant dense<0.000000e+00> : vector<8xf32>
    %23 = vector.multi_reduction <add>, %22, %cst_13 [1] : vector<8x128xf32> to vector<8xf32>
    %24 = vector.shape_cast %23 : vector<8xf32> to vector<8x1xf32>
    %cst_14 = arith.constant 1.562500e-02 : f32
    %25 = vector.broadcast %cst_14 : f32 to vector<8x1xf32>
    %26 = arith.mulf %24, %25 : vector<8x1xf32>
    %27 = arith.mulf %21, %21 : vector<8x1xf32>
    %28 = arith.subf %26, %27 : vector<8x1xf32>
    %cst_15 = arith.constant 0.000000e+00 : f32
    %29 = vector.broadcast %cst_15 : f32 to vector<8x1xf32>
    %30 = arith.maximumf %28, %29 : vector<8x1xf32>
    %31 = vector.broadcast %21 : vector<8x1xf32> to vector<8x128xf32>
    %32 = arith.subf %17, %31 : vector<8x128xf32>
    %cst_16 = arith.constant 9.99999974E-6 : f32
    %33 = vector.broadcast %cst_16 : f32 to vector<8x1xf32>
    %34 = arith.addf %30, %33 : vector<8x1xf32>
    %35 = math.rsqrt %34 : vector<8x1xf32>
    %c0_17 = arith.constant 0 : index
    %c0_18 = arith.constant 0 : index
    %36 = vector.load %arg6[%c0_17, %c0_18] : memref<1x128xf32, #tpu.memory_space<vmem>>, vector<1x128xf32>
    %37 = vector.broadcast %35 : vector<8x1xf32> to vector<8x128xf32>
    %38 = vector.broadcast %36 : vector<1x128xf32> to vector<8x128xf32>
    %39 = arith.mulf %37, %38 : vector<8x128xf32>
    %40 = arith.mulf %32, %39 : vector<8x128xf32>
    %c0_19 = arith.constant 0 : index
    %c0_20 = arith.constant 0 : index
    %41 = vector.load %arg7[%c0_19, %c0_20] : memref<1x128xf32, #tpu.memory_space<vmem>>, vector<1x128xf32>
    %42 = vector.broadcast %41 : vector<1x128xf32> to vector<8x128xf32>
    %43 = arith.addf %40, %42 : vector<8x128xf32>
    %44 = arith.truncf %43 : vector<8x128xf32> to vector<8x128xbf16>
    %c0_21 = arith.constant 0 : index
    %c0_22 = arith.constant 0 : index
    %45 = vector.load %arg8[%c0_21, %c0_22] : memref<128x256xbf16, #tpu.memory_space<vmem>>, vector<128x256xbf16>
    %cst_23 = arith.constant dense<0.000000e+00> : vector<8x256xf32>
    %46 = tpu.matmul %44, %45, %cst_23 {dimension_numbers = #tpu.dot_dimension_numbers<[1], [0], [0], [1], [0, 0, 1, 1], [], []>} : vector<8x128xbf16>, vector<128x256xbf16>, vector<8x256xf32> -> vector<8x256xf32>
    %c0_24 = arith.constant 0 : index
    %c0_25 = arith.constant 0 : index
    %47 = vector.load %arg9[%c0_24, %c0_25] : memref<1x256xf32, #tpu.memory_space<vmem>>, vector<1x256xf32>
    %48 = vector.broadcast %47 : vector<1x256xf32> to vector<8x256xf32>
    %49 = arith.addf %46, %48 : vector<8x256xf32>
    %50 = vector.extract_strided_slice %49 {offsets = [0, 0], sizes = [8, 128], strides = [1, 1]} : vector<8x256xf32> to vector<8x128xf32>
    %cst_26 = arith.constant 0.000000e+00 : f32
    %51 = vector.broadcast %cst_26 : f32 to vector<8x128xf32>
    %52 = arith.maximumf %50, %51 : vector<8x128xf32>
    %53 = vector.extract_strided_slice %49 {offsets = [0, 128], sizes = [8, 128], strides = [1, 1]} : vector<8x256xf32> to vector<8x128xf32>
    %54 = arith.truncf %52 : vector<8x128xf32> to vector<8x128xbf16>
    %c0_27 = arith.constant 0 : index
    %c0_28 = arith.constant 0 : index
    %55 = vector.load %arg10[%c0_27, %c0_28] : memref<128x128xbf16, #tpu.memory_space<vmem>>, vector<128x128xbf16>
    %cst_29 = arith.constant dense<0.000000e+00> : vector<8x128xf32>
    %56 = tpu.matmul %54, %55, %cst_29 {dimension_numbers = #tpu.dot_dimension_numbers<[1], [0], [0], [1], [0, 0, 1, 1], [], []>} : vector<8x128xbf16>, vector<128x128xbf16>, vector<8x128xf32> -> vector<8x128xf32>
    %c0_30 = arith.constant 0 : index
    %c0_31 = arith.constant 0 : index
    %57 = vector.load %arg11[%c0_30, %c0_31] : memref<1x128xf32, #tpu.memory_space<vmem>>, vector<1x128xf32>
    %58 = vector.broadcast %57 : vector<1x128xf32> to vector<8x128xf32>
    %59 = arith.addf %56, %58 : vector<8x128xf32>
    %60 = arith.addf %59, %53 : vector<8x128xf32>
    %cst_32 = arith.constant dense<0.000000e+00> : vector<8xf32>
    %61 = vector.multi_reduction <add>, %60, %cst_32 [1] : vector<8x128xf32> to vector<8xf32>
    %62 = vector.shape_cast %61 : vector<8xf32> to vector<8x1xf32>
    %cst_33 = arith.constant 3.125000e-02 : f32
    %63 = vector.broadcast %cst_33 : f32 to vector<8x1xf32>
    %64 = arith.mulf %62, %63 : vector<8x1xf32>
    %65 = arith.mulf %60, %60 : vector<8x128xf32>
    %cst_34 = arith.constant dense<0.000000e+00> : vector<8xf32>
    %66 = vector.multi_reduction <add>, %65, %cst_34 [1] : vector<8x128xf32> to vector<8xf32>
    %67 = vector.shape_cast %66 : vector<8xf32> to vector<8x1xf32>
    %cst_35 = arith.constant 3.125000e-02 : f32
    %68 = vector.broadcast %cst_35 : f32 to vector<8x1xf32>
    %69 = arith.mulf %67, %68 : vector<8x1xf32>
    %70 = arith.mulf %64, %64 : vector<8x1xf32>
    %71 = arith.subf %69, %70 : vector<8x1xf32>
    %cst_36 = arith.constant 0.000000e+00 : f32
    %72 = vector.broadcast %cst_36 : f32 to vector<8x1xf32>
    %73 = arith.maximumf %71, %72 : vector<8x1xf32>
    %74 = vector.broadcast %64 : vector<8x1xf32> to vector<8x128xf32>
    %75 = arith.subf %60, %74 : vector<8x128xf32>
    %cst_37 = arith.constant 9.99999974E-6 : f32
    %76 = vector.broadcast %cst_37 : f32 to vector<8x1xf32>
    %77 = arith.addf %73, %76 : vector<8x1xf32>
    %78 = math.rsqrt %77 : vector<8x1xf32>
    %c0_38 = arith.constant 0 : index
    %c0_39 = arith.constant 0 : index
    %79 = vector.load %arg12[%c0_38, %c0_39] : memref<1x128xf32, #tpu.memory_space<vmem>>, vector<1x128xf32>
    %80 = vector.broadcast %78 : vector<8x1xf32> to vector<8x128xf32>
    %81 = vector.broadcast %79 : vector<1x128xf32> to vector<8x128xf32>
    %82 = arith.mulf %80, %81 : vector<8x128xf32>
    %83 = arith.mulf %75, %82 : vector<8x128xf32>
    %c0_40 = arith.constant 0 : index
    %c0_41 = arith.constant 0 : index
    %84 = vector.load %arg13[%c0_40, %c0_41] : memref<1x128xf32, #tpu.memory_space<vmem>>, vector<1x128xf32>
    %85 = vector.broadcast %84 : vector<1x128xf32> to vector<8x128xf32>
    %86 = arith.addf %83, %85 : vector<8x128xf32>
    %c0_42 = arith.constant 0 : index
    %c0_43 = arith.constant 0 : index
    %87 = vector.load %arg14[%c0_42, %c0_43] : memref<8x128xf32, #tpu.memory_space<vmem>>, vector<8x128xf32>
    tpu.vector_store %arg14[%c0_42, %c0_43], %86 {strides = array<i32>} : memref<8x128xf32, #tpu.memory_space<vmem>>, vector<8x128xf32>,
    return
  }
  func.func @transform_0(%arg0: i32) -> (i32, i32) {
    %c0_i32 = arith.constant 0 : i32
    %c0_i32_0 = arith.constant 0 : i32
    return %arg0, %c0_i32 : i32, i32
  }
  func.func @transform_1(%arg0: i32) -> (i32, i32) {
    %c0_i32 = arith.constant 0 : i32
    %c0_i32_0 = arith.constant 0 : i32
    %c0_i32_1 = arith.constant 0 : i32
    return %c0_i32, %c0_i32_0 : i32, i32
  }
  func.func @transform_2(%arg0: i32) -> (i32, i32) {
    %c0_i32 = arith.constant 0 : i32
    %c0_i32_0 = arith.constant 0 : i32
    %c0_i32_1 = arith.constant 0 : i32
    return %c0_i32, %c0_i32_0 : i32, i32
  }
  func.func @transform_3(%arg0: i32) -> (i32, i32) {
    %c0_i32 = arith.constant 0 : i32
    %c0_i32_0 = arith.constant 0 : i32
    %c0_i32_1 = arith.constant 0 : i32
    return %c0_i32, %c0_i32_0 : i32, i32
  }
  func.func @transform_4(%arg0: i32) -> (i32, i32) {
    %c0_i32 = arith.constant 0 : i32
    %c0_i32_0 = arith.constant 0 : i32
    %c0_i32_1 = arith.constant 0 : i32
    return %c0_i32, %c0_i32_0 : i32, i32
  }
  func.func @transform_5(%arg0: i32) -> (i32, i32) {
    %c0_i32 = arith.constant 0 : i32
    %c0_i32_0 = arith.constant 0 : i32
    %c0_i32_1 = arith.constant 0 : i32
    return %c0_i32, %c0_i32_0 : i32, i32
  }
  func.func @transform_6(%arg0: i32) -> (i32, i32) {
    %c0_i32 = arith.constant 0 : i32
    %c0_i32_0 = arith.constant 0 : i32
    %c0_i32_1 = arith.constant 0 : i32
    return %c0_i32, %c0_i32_0 : i32, i32
  }
  func.func @transform_7(%arg0: i32) -> (i32, i32) {
    %c0_i32 = arith.constant 0 : i32
    %c0_i32_0 = arith.constant 0 : i32
    %c0_i32_1 = arith.constant 0 : i32
    return %c0_i32, %c0_i32_0 : i32, i32
  }
  func.func @transform_8(%arg0: i32) -> (i32, i32) {
    %c0_i32 = arith.constant 0 : i32
    %c0_i32_0 = arith.constant 0 : i32
    %c0_i32_1 = arith.constant 0 : i32
    return %c0_i32, %c0_i32_0 : i32, i32
  }
  func.func @transform_9(%arg0: i32) -> (i32, i32) {
    %c0_i32 = arith.constant 0 : i32
    %c0_i32_0 = arith.constant 0 : i32
    %c0_i32_1 = arith.constant 0 : i32
    return %c0_i32, %c0_i32_0 : i32, i32
  }
  func.func @transform_10(%arg0: i32) -> (i32, i32) {
    %c0_i32 = arith.constant 0 : i32
    %c0_i32_0 = arith.constant 0 : i32
    %c0_i32_1 = arith.constant 0 : i32
    return %c0_i32, %c0_i32_0 : i32, i32
  }
  func.func @transform_11(%arg0: i32) -> (i32, i32) {
    %c0_i32 = arith.constant 0 : i32
    %c0_i32_0 = arith.constant 0 : i32
    %c0_i32_1 = arith.constant 0 : i32
    return %c0_i32, %c0_i32_0 : i32, i32
  }
  func.func @transform_12(%arg0: i32) -> (i32, i32) {
    %c0_i32 = arith.constant 0 : i32
    %c0_i32_0 = arith.constant 0 : i32
    %c0_i32_1 = arith.constant 0 : i32
    return %c0_i32, %c0_i32_0 : i32, i32
  }
  func.func @transform_13(%arg0: i32) -> (i32, i32) {
    %c0_i32 = arith.constant 0 : i32
    %c0_i32_0 = arith.constant 0 : i32
    return %arg0, %c0_i32 : i32, i32
  }
}

</mosaic_0001>

<llo_original>
// kernel: _forward_impl.2
$region0: #{_forward_impl.2}
  #allocation0 [shape = 'u32[]', space=smem, size = 0x4, offset = 0x4, fixed_abs, tag = 'smem constant byte address 0x4 - core index']
  #allocation1 [shape = 'u32[72,128]{1,0:T(1,128)}', space=vmem, size = 0x9000, scoped, tag = 'internal scratch']
  %s0 = inlined_call_operand.vmem [shape: f32[24,16], index: 0, kind: input, shape index: {}]
  %s1 = inlined_call_operand.vmem [shape: bf16[16,256], index: 1, kind: input, shape index: {}]
  %s2 = inlined_call_operand.vmem [shape: f32[1,256], index: 2, kind: input, shape index: {}]
  %s3 = inlined_call_operand.hbm [shape: bf16[128,128], index: 3, kind: input, shape index: {}]
  %s4 = inlined_call_operand.vmem [shape: f32[1,128], index: 4, kind: input, shape index: {}]
  %s5 = inlined_call_operand.vmem [shape: f32[1,128], index: 5, kind: input, shape index: {}]
  %s6 = inlined_call_operand.vmem [shape: f32[1,128], index: 6, kind: input, shape index: {}]
  %s7 = inlined_call_operand.vmem [shape: f32[24,128], index: 7, kind: output, shape index: {}]
  %s8 = sld [smem:[#allocation0]]
  $region113: #{_forward_impl.2} parent=0
    _
  %s10 = ssub.s32 1, %s8
  %s11 = scalar_select 0, %s10, %s8
  $region1: #{_forward_impl.2} parent=0
    #allocation2 [shape = 'u8[32768]{0}', space=vmem, size = 0x8000, scoped, tag = 'input window, operand 3, single buffered']
    #allocation3 [shape = 's32[2]{0}', space=sflag, size = 0x8, scoped, tag = 'scoped memory for _forward_impl.2']
    #allocation4 [shape = 'u8[16384]{0}', space=vmem, size = 0x4000, scoped, tag = 'output window, operand 0']
    %12 = vsyncpa [#allocation3], 0
    loop: start=0, step=1, limit=4
    $region2: #{_forward_impl.2} parent=1 // loop_pre_header
      _
    $region3: #{_forward_impl.2} parent=1 // loop_header
      %s14 = sphi 0, %s18
      %p15 = scmp.ge.s32.totalorder %s14, 4
      %s24 = sphi 0, %s26
      %s27 = sphi 0, %s24
      %s28 = sphi 0, %s27
      %s44 = sphi 0, %s28
      %s48 = sphi 0, %s48
      %s50 = sphi 0, %s48
      %s51 = sphi 0, %s50
      %s65 = sphi 0, %s51
      %s69 = sphi 0, %s69
      %s71 = sphi 0, %s69
      %s72 = sphi 0, %s71
      %s86 = sphi 0, %s72
      %s90 = sphi 0, %s90
      %s92 = sphi 0, %s90
      %s93 = sphi 0, %s92
      %s107 = sphi 0, %s93
      %s111 = sphi 0, %s111
      %s113 = sphi 0, %s111
      %s114 = sphi 0, %s113
      %s128 = sphi 0, %s114
      %s132 = sphi 0, %s132
      %s134 = sphi 0, %s132
      %s135 = sphi 0, %s134
      %s149 = sphi 0, %s135
      %s153 = sphi 0, %s153
      %s155 = sphi 0, %s153
      %s156 = sphi 0, %s155
      %s170 = sphi 0, %s156
      %s176 = sphi 0, %s178
      %s179 = sphi 0, %s176
      %s180 = sphi 0, %s179
      %s196 = sphi 0, %s180
    $region4: #{_forward_impl.2} parent=1 // loop_header_branch
      %17 = sbr.rel (%p15) target = $region8
    $region5: #{_forward_impl.2} parent=1 // loop_body
      %s19 = ssub.s32 %s14, 1
      %s20 = ssub.s32 %s14, 2
      %s21 = sadd.s32 %s14, 1
      %s22 = ssub.s32 %s14, %s21
      %p23 = scmp.eq.s32.totalorder %s22, 0
      %s25 = sadd.s32 %s24, 1
      %s26 = scalar_select %p23, %s24, %s25
      %p29 = pneg %p23
      %p30 = scmp.eq.s32.totalorder %s14, 1
      %p31 = por %p29, %p30
      %p32 = scmp.ne.s32.totalorder %s24, %s27
      %p33 = scmp.eq.s32.totalorder %s14, 0
      %p34 = por %p32, %p33
      %p35 = scmp.ne.s32.totalorder %s24, %s27
      %p36 = scmp.eq.s32.totalorder %s19, 1
      %p37 = por %p35, %p36
      %p38 = scmp.ne.s32.totalorder %s27, %s28
      %p39 = scmp.eq.s32.totalorder %s19, 0
      %p40 = por %p38, %p39
      %p41 = scmp.ne.s32.totalorder %s27, %s28
      %p42 = scmp.eq.s32.totalorder %s20, 1
      %p43 = por %p41, %p42
      %p45 = scmp.ne.s32.totalorder %s28, %s44
      %p46 = scmp.eq.s32.totalorder %s20, 0
      %p47 = por %p45, %p46
      %s49 = sadd.s32 %s48, 1
      %p52 = scmp.eq.s32.totalorder %s14, 1
      %p53 = scmp.ne.s32.totalorder %s48, %s50
      %p54 = scmp.eq.s32.totalorder %s14, 0
      %p55 = por %p53, %p54
      %p56 = scmp.ne.s32.totalorder %s48, %s50
      %p57 = scmp.eq.s32.totalorder %s19, 1
      %p58 = por %p56, %p57
      %p59 = scmp.ne.s32.totalorder %s50, %s51
      %p60 = scmp.eq.s32.totalorder %s19, 0
      %p61 = por %p59, %p60
      %p62 = scmp.ne.s32.totalorder %s50, %s51
      %p63 = scmp.eq.s32.totalorder %s20, 1
      %p64 = por %p62, %p63
      %p66 = scmp.ne.s32.totalorder %s51, %s65
      %p67 = scmp.eq.s32.totalorder %s20, 0
      %p68 = por %p66, %p67
      %s70 = sadd.s32 %s69, 1
      %p73 = scmp.eq.s32.totalorder %s14, 1
      %p74 = scmp.ne.s32.totalorder %s69, %s71
      %p75 = scmp.eq.s32.totalorder %s14, 0
      %p76 = por %p74, %p75
      %p77 = scmp.ne.s32.totalorder %s69, %s71
      %p78 = scmp.eq.s32.totalorder %s19, 1
      %p79 = por %p77, %p78
      %p80 = scmp.ne.s32.totalorder %s71, %s72
      %p81 = scmp.eq.s32.totalorder %s19, 0
      %p82 = por %p80, %p81
      %p83 = scmp.ne.s32.totalorder %s71, %s72
      %p84 = scmp.eq.s32.totalorder %s20, 1
      %p85 = por %p83, %p84
      %p87 = scmp.ne.s32.totalorder %s72, %s86
      %p88 = scmp.eq.s32.totalorder %s20, 0
      %p89 = por %p87, %p88
      %s91 = sadd.s32 %s90, 1
      %p94 = scmp.eq.s32.totalorder %s14, 1
      %p95 = scmp.ne.s32.totalorder %s90, %s92
      %p96 = scmp.eq.s32.totalorder %s14, 0
      %p97 = por %p95, %p96
      %p98 = scmp.ne.s32.totalorder %s90, %s92
      %p99 = scmp.eq.s32.totalorder %s19, 1
      %p100 = por %p98, %p99
      %p101 = scmp.ne.s32.totalorder %s92, %s93
      %p102 = scmp.eq.s32.totalorder %s19, 0
      %p103 = por %p101, %p102
      %p104 = scmp.ne.s32.totalorder %s92, %s93
      %p105 = scmp.eq.s32.totalorder %s20, 1
      %p106 = por %p104, %p105
      %p108 = scmp.ne.s32.totalorder %s93, %s107
      %p109 = scmp.eq.s32.totalorder %s20, 0
      %p110 = por %p108, %p109
      %s112 = sadd.s32 %s111, 1
      %p115 = scmp.eq.s32.totalorder %s14, 1
      %p116 = scmp.ne.s32.totalorder %s111, %s113
      %p117 = scmp.eq.s32.totalorder %s14, 0
      %p118 = por %p116, %p117
      %p119 = scmp.ne.s32.totalorder %s111, %s113
      %p120 = scmp.eq.s32.totalorder %s19, 1
      %p121 = por %p119, %p120
      %p122 = scmp.ne.s32.totalorder %s113, %s114
      %p123 = scmp.eq.s32.totalorder %s19, 0
      %p124 = por %p122, %p123
      %p125 = scmp.ne.s32.totalorder %s113, %s114
      %p126 = scmp.eq.s32.totalorder %s20, 1
      %p127 = por %p125, %p126
      %p129 = scmp.ne.s32.totalorder %s114, %s128
      %p130 = scmp.eq.s32.totalorder %s20, 0
      %p131 = por %p129, %p130
      %s133 = sadd.s32 %s132, 1
      %p136 = scmp.eq.s32.totalorder %s14, 1
      %p137 = scmp.ne.s32.totalorder %s132, %s134
      %p138 = scmp.eq.s32.totalorder %s14, 0
      %p139 = por %p137, %p138
      %p140 = scmp.ne.s32.totalorder %s132, %s134
      %p141 = scmp.eq.s32.totalorder %s19, 1
      %p142 = por %p140, %p141
      %p143 = scmp.ne.s32.totalorder %s134, %s135
      %p144 = scmp.eq.s32.totalorder %s19, 0
      %p145 = por %p143, %p144
      %p146 = scmp.ne.s32.totalorder %s134, %s135
      %p147 = scmp.eq.s32.totalorder %s20, 1
      %p148 = por %p146, %p147
      %p150 = scmp.ne.s32.totalorder %s135, %s149
      %p151 = scmp.eq.s32.totalorder %s20, 0
      %p152 = por %p150, %p151
      %s154 = sadd.s32 %s153, 1
      %p157 = scmp.eq.s32.totalorder %s14, 1
      %p158 = scmp.ne.s32.totalorder %s153, %s155
      %p159 = scmp.eq.s32.totalorder %s14, 0
      %p160 = por %p158, %p159
      %p161 = scmp.ne.s32.totalorder %s153, %s155
      %p162 = scmp.eq.s32.totalorder %s19, 1
      %p163 = por %p161, %p162
      %p164 = scmp.ne.s32.totalorder %s155, %s156
      %p165 = scmp.eq.s32.totalorder %s19, 0
      %p166 = por %p164, %p165
      %p167 = scmp.ne.s32.totalorder %s155, %s156
      %p168 = scmp.eq.s32.totalorder %s20, 1
      %p169 = por %p167, %p168
      %p171 = scmp.ne.s32.totalorder %s156, %s170
      %p172 = scmp.eq.s32.totalorder %s20, 0
      %p173 = por %p171, %p172
      %s174 = ssub.s32 %s14, %s21
      %p175 = scmp.eq.s32.totalorder %s174, 0
      %s177 = sadd.s32 %s176, 1
      %s178 = scalar_select %p175, %s176, %s177
      %p181 = pneg %p175
      %p182 = scmp.eq.s32.totalorder %s14, 1
      %p183 = por %p181, %p182
      %p184 = scmp.ne.s32.totalorder %s176, %s179
      %p185 = scmp.eq.s32.totalorder %s14, 0
      %p186 = por %p184, %p185
      %p187 = scmp.ne.s32.totalorder %s176, %s179
      %p188 = scmp.eq.s32.totalorder %s19, 1
      %p189 = por %p187, %p188
      %p190 = scmp.ne.s32.totalorder %s179, %s180
      %p191 = scmp.eq.s32.totalorder %s19, 0
      %p192 = por %p190, %p191
      %p193 = scmp.ne.s32.totalorder %s179, %s180
      %p194 = scmp.eq.s32.totalorder %s20, 1
      %p195 = por %p193, %p194
      %p197 = scmp.ne.s32.totalorder %s180, %s196
      %p198 = scmp.eq.s32.totalorder %s20, 0
      %p199 = por %p197, %p198
      %p200 = scmp.le.s32.totalorder 1, %s14
      %p201 = scmp.lt.s32.totalorder %s14, 3
      %p202 = pnand %p200, %p201
      %p203 = pneg %p202
      // Predicated region
      $region9: #{_forward_impl.2} parent=5 // pred_check
        _
      $region10: #{_forward_impl.2} parent=5 // pred_check_branch
        %205 = sbr.rel (%p202) target = $region12
      $region11: #{_forward_impl.2} parent=5 // pred_region
        %s206 = ssub.s32 %s14, 1
        // Predicated region
        $region13: #{_forward_impl.2} parent=11 // pred_check
          %p207 = pneg %p61
        $region14: #{_forward_impl.2} parent=11 // pred_check_branch
          %209 = sbr.rel (%p207) target = $region16
        $region15: #{_forward_impl.2} parent=11 // pred_region
          _
        $region16: #{_forward_impl.2} parent=11 // pred_fallthru
          _
        // Predicated region
        $region17: #{_forward_impl.2} parent=11 // pred_check
          %p210 = pneg %p82
        $region18: #{_forward_impl.2} parent=11 // pred_check_branch
          %212 = sbr.rel (%p210) target = $region20
        $region19: #{_forward_impl.2} parent=11 // pred_region
          _
        $region20: #{_forward_impl.2} parent=11 // pred_fallthru
          _
        // Predicated region
        $region21: #{_forward_impl.2} parent=11 // pred_check
          %p213 = pneg %p103
        $region22: #{_forward_impl.2} parent=11 // pred_check_branch
          %215 = sbr.rel (%p213) target = $region24
        $region23: #{_forward_impl.2} parent=11 // pred_region
          %217 = vsyncadd [#allocation3], 0
          %s218 = sshll.u32 %s3, 4
          %s219 = int_to_ptr.hbm [resolvable:$true] %s218
          %s220 = sshll.u32 [#allocation2], 4
          %s221 = int_to_ptr.vmem [resolvable:$true] %s220
          %226 = dma.hbm_to_vmem [thread:$0]  %s219, 1024, %s221, [#allocation3], 64, 64, 4
        $region24: #{_forward_impl.2} parent=11 // pred_fallthru
          _
        // Predicated region
        $region25: #{_forward_impl.2} parent=11 // pred_check
          %p227 = pneg %p124
        $region26: #{_forward_impl.2} parent=11 // pred_check_branch
          %229 = sbr.rel (%p227) target = $region28
        $region27: #{_forward_impl.2} parent=11 // pred_region
          _
        $region28: #{_forward_impl.2} parent=11 // pred_fallthru
          _
        // Predicated region
        $region29: #{_forward_impl.2} parent=11 // pred_check
          %p230 = pneg %p145
        $region30: #{_forward_impl.2} parent=11 // pred_check_branch
          %232 = sbr.rel (%p230) target = $region32
        $region31: #{_forward_impl.2} parent=11 // pred_region
          _
        $region32: #{_forward_impl.2} parent=11 // pred_fallthru
          _
        // Predicated region
        $region33: #{_forward_impl.2} parent=11 // pred_check
          %p233 = pneg %p166
        $region34: #{_forward_impl.2} parent=11 // pred_check_branch
          %235 = sbr.rel (%p233) target = $region36
        $region35: #{_forward_impl.2} parent=11 // pred_region
          _
        $region36: #{_forward_impl.2} parent=11 // pred_fallthru
          _
      $region12: #{_forward_impl.2} parent=5 // pred_fallthru
        _
      %p236 = scmp.lt.s32.totalorder %s14, 2
      // Predicated region
      $region37: #{_forward_impl.2} parent=5 // pred_check
        %p237 = pneg %p236
      $region38: #{_forward_impl.2} parent=5 // pred_check_branch
        %239 = sbr.rel (%p237) target = $region40
      $region39: #{_forward_impl.2} parent=5 // pred_region
        // Predicated region
        $region41: #{_forward_impl.2} parent=39 // pred_check
          %p240 = pneg %p34
        $region42: #{_forward_impl.2} parent=39 // pred_check_branch
          %242 = sbr.rel (%p240) target = $region44
        $region43: #{_forward_impl.2} parent=39 // pred_region
          %s243 = smul.u32 2, %s14
          %s244 = ssub.s32 3, %s243
          %p245 = scmp.lt.s32.totalorder %s244, 2
          %s246 = scalar_select %p245, %s244, 2
          %s247 = smul.u32 8, %s246
          %p248 = scmp.lt.s32.totalorder %s243, 2
          %s249 = scalar_select %p248, %s243, 2
          %s250 = smul.addr %s249, 8
          %s251 = scalar_lea.vmem %s0, %s250
          %s252 = smul.u32 2, %s14
          %s253 = ssub.s32 3, %s252
          %p254 = scmp.lt.s32.totalorder %s253, 2
          %s255 = scalar_select %p254, %s253, 2
          %s256 = smul.u32 8, %s255
        $region44: #{_forward_impl.2} parent=39 // pred_fallthru
          _
      $region40: #{_forward_impl.2} parent=5 // pred_fallthru
        _
      %p257 = scmp.le.s32.totalorder 1, %s14
      %p258 = scmp.lt.s32.totalorder %s14, 3
      %p259 = pnand %p257, %p258
      %p260 = pneg %p259
      // Predicated region
      $region45: #{_forward_impl.2} parent=5 // pred_check
        _
      $region46: #{_forward_impl.2} parent=5 // pred_check_branch
        %262 = sbr.rel (%p259) target = $region48
      $region47: #{_forward_impl.2} parent=5 // pred_region
        %s263 = ssub.s32 %s14, 1
        // Predicated region
        $region49: #{_forward_impl.2} parent=47 // pred_check
          %p264 = pneg %p103
        $region50: #{_forward_impl.2} parent=47 // pred_check_branch
          %266 = sbr.rel (%p264) target = $region52
        $region51: #{_forward_impl.2} parent=47 // pred_region
          %268 = dma.done [#allocation3], 1024
        $region52: #{_forward_impl.2} parent=47 // pred_fallthru
          _
        %s269 = smul.u32 2, %s19
        %s270 = ssub.s32 3, %s269
        %p271 = scmp.lt.s32.totalorder %s270, 2
        %s272 = scalar_select %p271, %s270, 2
        %s273 = smul.u32 8, %s272
        %p274 = scmp.lt.s32.totalorder %s269, 2
        %s275 = scalar_select %p274, %s269, 2
        %s276 = smul.addr %s275, 8
        %s277 = scalar_lea.vmem %s0, %s276
        %p278 = pneg %p40
        %p279 = pneg %p37
        %p280 = pneg %p61
        %p281 = pneg %p58
        %p282 = pneg %p82
        %p283 = pneg %p79
        %p284 = pneg %p103
        %p285 = pneg %p100
        %p286 = pneg %p124
        %p287 = pneg %p121
        %p288 = pneg %p145
        %p289 = pneg %p142
        %p290 = pneg %p166
        %p291 = pneg %p163
        %p292 = pneg %p192
        %p293 = pneg %p189
        %s294 = sand.u32 %s179, 1
        %s295 = sand.u32 %s179, 1
        %s296 = smul.addr %s295, 16
        %s297 = scalar_lea.vmem [#allocation4], %s296
        %s298 = smul.u32 2, %s19
        %s299 = ssub.s32 3, %s298
        %p300 = scmp.lt.s32.totalorder %s299, 2
        %s301 = scalar_select %p300, %s299, 2
        %s302 = smul.u32 8, %s301
        %p303 = scmp.lt.s32.totalorder %s298, 2
        %s304 = scalar_select %p303, %s298, 2
        %s305 = smul.addr %s304, 8
        %s306 = scalar_lea.vmem %s0, %s305
        %s307 = smul.u32 2, %s19
        %s308 = ssub.s32 3, %s307
        %p309 = scmp.lt.s32.totalorder %s308, 2
        %s310 = scalar_select %p309, %s308, 2
        %s311 = smul.u32 8, %s310
        %s312 = smul.u32 2, %s19
        %s313 = ssub.s32 3, %s312
        %p314 = scmp.lt.s32.totalorder %s313, 2
        %s315 = scalar_select %p314, %s313, 2
        %s316 = smul.u32 8, %s315
        %v318 = vld [vmem:[%s306] sm:$0xff]
        %v319 = vld [vmem:[%s306 + $0x8] sm:$0xff]
        %v320 = vpack.c.bf16 %v319, %v318
        %v321 = vld [vmem:[%s1] sm:$0xff]
        %v322 = vld [vmem:[%s1 + $0x8] sm:$0xff]
        %v323 = vld [vmem:[%s2] sm:$0x3]
        %v325 = vperm.slane %v323, 0
        %v326 = vperm.slane %v323, 1
        %v331 = vunpack.c.l.b16 %v321
        %v332 = vunpack.c.h.b16 %v321
        %v333 = vunpack.c.l.b16 %v322
        %v334 = vunpack.c.h.b16 %v322
        %v335 = vpack.c.b16 %v333, %v331
        %v336 = vpack.c.b16 %v334, %v332
        %vm339 = vcmask 130048
        %v341 = vsel %vm339, %v320, 0
        %343 = vmatpush.bf16.msra.mxu0 0
        %344 = vmatpush.bf16.msra.mxu0 0
        %345 = vmatpush.bf16.msra.mxu0 0
        %346 = vmatpush.bf16.msra.mxu0 0
        %347 = vmatpush.bf16.msra.mxu0 0
        %348 = vmatpush.bf16.msra.mxu0 0
        %349 = vmatpush.bf16.msra.mxu0 0
        %350 = vmatpush.bf16.msra.mxu0 %v335
        %351 = vmatmul.bf16.gmra.mxu0 %v341
        %v352 = vpop.f32.mrf.mxu0
        %v353 = vadd.f32 %v325, %v352
        %v354 = vpop.f32.mrf.mxu0
        %v355 = vadd.f32 %v325, %v354
        %356 = vdwg.mxu0
        %357 = vmatpush.bf16.msra.mxu0 0
        %358 = vmatpush.bf16.msra.mxu0 0
        %359 = vmatpush.bf16.msra.mxu0 0
        %360 = vmatpush.bf16.msra.mxu0 0
        %361 = vmatpush.bf16.msra.mxu0 0
        %362 = vmatpush.bf16.msra.mxu0 0
        %363 = vmatpush.bf16.msra.mxu0 0
        %364 = vmatpush.bf16.msra.mxu0 %v336
        %365 = vmatmul.bf16.gmra.mxu0 %v341
        %v366 = vpop.f32.mrf.mxu0
        %v367 = vadd.f32 %v326, %v366
        %v368 = vpop.f32.mrf.mxu0
        %v369 = vadd.f32 %v326, %v368
        %370 = vdwg.mxu0
        %v371 = vmax.f32 %v353, 0.0
        %v372 = vmax.f32 %v355, 0.0
        %v373 = vpack.c.bf16 %v372, %v371
        %v374 = vld [vmem:[#allocation2] sm:$0xf]
        %v375 = vld [vmem:[#allocation2 + $0x4] sm:$0xf]
        %v376 = vld [vmem:[#allocation2 + $0x8] sm:$0xf]
        %v377 = vld [vmem:[#allocation2 + $0xc] sm:$0xf]
        %v378 = vld [vmem:[#allocation2 + $0x10] sm:$0xf]
        %v379 = vld [vmem:[#allocation2 + $0x14] sm:$0xf]
        %v380 = vld [vmem:[#allocation2 + $0x18] sm:$0xf]
        %v381 = vld [vmem:[#allocation2 + $0x1c] sm:$0xf]
        %v382 = vld [vmem:[#allocation2 + $0x20] sm:$0xf]
        %v383 = vld [vmem:[#allocation2 + $0x24] sm:$0xf]
        %v384 = vld [vmem:[#allocation2 + $0x28] sm:$0xf]
        %v385 = vld [vmem:[#allocation2 + $0x2c] sm:$0xf]
        %v386 = vld [vmem:[#allocation2 + $0x30] sm:$0xf]
        %v387 = vld [vmem:[#allocation2 + $0x34] sm:$0xf]
        %v388 = vld [vmem:[#allocation2 + $0x38] sm:$0xf]
        %v389 = vld [vmem:[#allocation2 + $0x3c] sm:$0xf]
        %v390 = vld [vmem:[%s4] sm:$0x1]
        %v392 = vperm.slane %v390, 0
        %v410 = vunpack.c.l.b16 %v374
        %v411 = vunpack.c.l.b16 %v375
        %v412 = vunpack.c.l.b16 %v376
        %v413 = vunpack.c.l.b16 %v377
        %v414 = vunpack.c.l.b16 %v378
        %v415 = vunpack.c.l.b16 %v379
        %v416 = vunpack.c.l.b16 %v380
        %v417 = vunpack.c.l.b16 %v381
        %v418 = vunpack.c.l.b16 %v382
        %v419 = vunpack.c.l.b16 %v383
        %v420 = vunpack.c.l.b16 %v384
        %v421 = vunpack.c.l.b16 %v385
        %v422 = vunpack.c.l.b16 %v386
        %v423 = vunpack.c.l.b16 %v387
        %v424 = vunpack.c.l.b16 %v388
        %v425 = vunpack.c.l.b16 %v389
        %v426 = vpack.c.b16 %v411, %v410
        %v427 = vpack.c.b16 %v413, %v412
        %v428 = vpack.c.b16 %v415, %v414
        %v429 = vpack.c.b16 %v417, %v416
        %v430 = vpack.c.b16 %v419, %v418
        %v431 = vpack.c.b16 %v421, %v420
        %v432 = vpack.c.b16 %v423, %v422
        %v433 = vpack.c.b16 %v425, %v424
        %442 = vmatpush.bf16.msra.mxu0 %v433
        %443 = vmatpush.bf16.msra.mxu0 %v432
        %444 = vmatpush.bf16.msra.mxu0 %v431
        %445 = vmatpush.bf16.msra.mxu0 %v430
        %446 = vmatpush.bf16.msra.mxu0 %v429
        %447 = vmatpush.bf16.msra.mxu0 %v428
        %448 = vmatpush.bf16.msra.mxu0 %v427
        %449 = vmatpush.bf16.msra.mxu0 %v426
        %450 = vmatmul.bf16.gmra.mxu0 %v373
        %v451 = vpop.f32.mrf.mxu0
        %v452 = vadd.f32 %v392, %v451
        %v453 = vpop.f32.mrf.mxu0
        %v454 = vadd.f32 %v392, %v453
        %455 = vdwg.mxu0
        %v456 = vadd.f32 %v452, %v367
        %v457 = vadd.f32 %v454, %v369
        %458 = vadd.xlane.f32.xlu0 %v456
        %v459 = vpop.xlane.xlu0 %458
        %460 = vadd.xlane.f32.xlu0 %v457
        %v461 = vpop.xlane.xlu0 %460
        %v462 = vmul.f32 %v459, 0.0625
        %v463 = vmul.f32 %v461, 0.0625
        %v464 = vmul.f32 %v456, %v456
        %v465 = vmul.f32 %v457, %v457
        %466 = vadd.xlane.f32.xlu0 %v464
        %v467 = vpop.xlane.xlu0 %466
        %468 = vadd.xlane.f32.xlu0 %v465
        %v469 = vpop.xlane.xlu0 %468
        %v470 = vmul.f32 %v467, 0.0625
        %v471 = vmul.f32 %v469, 0.0625
        %v472 = vmul.f32 %v462, %v462
        %v473 = vmul.f32 %v463, %v463
        %v474 = vsub.f32 %v470, %v472
        %v475 = vsub.f32 %v471, %v473
        %v476 = vmax.f32 %v474, 0.0
        %v477 = vmax.f32 %v475, 0.0
        %v478 = vsub.f32 %v456, %v462
        %v479 = vsub.f32 %v457, %v463
        %v480 = vadd.f32 %v476, 1e-05
        %v481 = vadd.f32 %v477, 1e-05
        %v482 = vrsqrt.pop %v480
        %v483 = vmul.f32 %v482, %v480
        %v484 = vmul.f32 %v483, %v482
        %v485 = vmul.f32 0.5, %v484
        %v486 = vsub.f32 1.5, %v485
        %v487 = vmul.f32 %v482, %v486
        %vm488 = vweird.f32 %v480
        %vm489 = vweird.f32 %v482
        %vm490 = vmor %vm488, %vm489
        %v491 = vsel %vm490, %v482, %v487
        %v492 = vrsqrt.pop %v481
        %v493 = vmul.f32 %v492, %v481
        %v494 = vmul.f32 %v493, %v492
        %v495 = vmul.f32 0.5, %v494
        %v496 = vsub.f32 1.5, %v495
        %v497 = vmul.f32 %v492, %v496
        %vm498 = vweird.f32 %v481
        %vm499 = vweird.f32 %v492
        %vm500 = vmor %vm498, %vm499
        %v501 = vsel %vm500, %v492, %v497
        %v502 = vld [vmem:[%s5] sm:$0x1]
        %v504 = vperm.slane %v502, 0
        %v506 = vmul.f32 %v491, %v504
        %v507 = vmul.f32 %v501, %v504
        %v508 = vmul.f32 %v478, %v506
        %v509 = vmul.f32 %v479, %v507
        %v510 = vld [vmem:[%s6] sm:$0x1]
        %v512 = vperm.slane %v510, 0
        %v514 = vadd.f32 %v508, %v512
        %v515 = vadd.f32 %v509, %v512
        %516 = vst [vmem:[%s297] sm:$0xff] %v514
        %517 = vst [vmem:[%s297 + $0x8] sm:$0xff] %v515
        %s518 = sand.u32 %s179, 1
        %s519 = sand.u32 %s179, 1
        %s520 = smul.addr %s519, 16
        %s521 = scalar_lea.vmem [#allocation4], %s520
        // Predicated region
        $region53: #{_forward_impl.2} parent=47 // pred_check
          %p522 = pneg %p189
        $region54: #{_forward_impl.2} parent=47 // pred_check_branch
          %524 = sbr.rel (%p522) target = $region56
        $region55: #{_forward_impl.2} parent=47 // pred_region
          %s525 = smul.u32 2, %s19
          %s526 = ssub.s32 3, %s525
          %p527 = scmp.lt.s32.totalorder %s526, 2
          %s528 = scalar_select %p527, %s526, 2
          %s529 = smul.u32 8, %s528
          %p530 = scmp.ne.s32.totalorder 0, %s529
          %s531 = smul.addr %s525, 8
          %s532 = scalar_lea.vmem %s7, %s531
          // Predicated region
          $region57: #{_forward_impl.2} parent=55 // pred_check
            %p533 = pneg %p530
          $region58: #{_forward_impl.2} parent=55 // pred_check_branch
            %535 = sbr.rel (%p533) target = $region60
          $region59: #{_forward_impl.2} parent=55 // pred_region
            // Predicated region
            $region61: #{_forward_impl.2} parent=59 // pred_check
              _
            $region62: #{_forward_impl.2} parent=59 // pred_check_branch
              %537 = sbr.rel (0) target = $region64
            $region63: #{_forward_impl.2} parent=59 // pred_region
              // Predicated region
              $region83: #{_forward_impl.2} parent=63 // pred_check
                _
              $region84: #{_forward_impl.2} parent=63 // pred_check_branch
                %589 = sbr.rel (0) target = $region86
              $region85: #{_forward_impl.2} parent=63 // pred_region
                %s590 = sshrl.u32 %s528, 1
                // While loop
                $region87: #{_forward_impl.2} parent=85 // loop_pre_header
                  _
                $region88: #{_forward_impl.2} parent=85 // loop_header
                  %s592 = sphi 0, %s594
                  %p593 = scmp.ge.s32.totalorder %s592, %s590
                  %s597 = sphi 0, %s606
                  %s598 = sphi %s521, %s609
                  %s599 = sphi %s532, %s610
                $region89: #{_forward_impl.2} parent=85 // loop_header_branch
                  %596 = sbr.rel (%p593) target = $region93
                $region90: #{_forward_impl.2} parent=85 // loop_body
                  %v600 = vld [vmem:[%s598] sm:$0xff]
                  %601 = vst [vmem:[%s599] sm:$0xff] %v600
                  %v602 = vld [vmem:[%s598 + $0x8] sm:$0xff]
                  %603 = vst [vmem:[%s599 + $0x8] sm:$0xff] %v602
                  %s604 = sadd.s32 1, %s597
                  %p605 = scmp.ge.s32.totalorder %s604, %s590
                  %s606 = scalar_select %p605, 0, %s604
                  %s607 = smul.u32 %s606, 16
                  %s608 = smul.u32 %s606, 16
                  %s609 = scalar_lea.vmem %s521, %s607 [#allocation4]
                  %s610 = scalar_lea.vmem %s532, %s608
                $region91: #{_forward_impl.2} parent=85 // loop_footer
                  %s594 = sadd.s32 %s592, 1
                $region92: #{_forward_impl.2} parent=85 // loop_footer_branch
                  %591 = sbr.rel target = $region88
                $region93: #{_forward_impl.2} parent=85 // loop_exit
                  _
                %s611 = sshrl.u32 %s528, 1
                %s612 = sand.u32 %s528, 1
                %s613 = smul.u32 %s611, 2
                %s614 = smul.u32 8, %s613
                %s615 = scalar_lea.vmem %s521, %s614 [#allocation4]
                %s616 = smul.u32 8, %s613
                %s617 = scalar_lea.vmem %s532, %s616
                // While loop
                $region94: #{_forward_impl.2} parent=85 // loop_pre_header
                  _
                $region95: #{_forward_impl.2} parent=85 // loop_header
                  %s619 = sphi 0, %s621
                  %p620 = scmp.ge.s32.totalorder %s619, %s612
                  %s624 = sphi 0, %s631
                  %s625 = sphi %s615, %s634
                  %s626 = sphi %s617, %s635
                $region96: #{_forward_impl.2} parent=85 // loop_header_branch
                  %623 = sbr.rel (%p620) target = $region100
                $region97: #{_forward_impl.2} parent=85 // loop_body
                  %v627 = vld [vmem:[%s625] sm:$0xff]
                  %628 = vst [vmem:[%s626] sm:$0xff] %v627
                  %s629 = sadd.s32 1, %s624
                  %p630 = scmp.ge.s32.totalorder %s629, %s612
                  %s631 = scalar_select %p630, 0, %s629
                  %s632 = smul.u32 %s631, 8
                  %s633 = smul.u32 %s631, 8
                  %s634 = scalar_lea.vmem %s615, %s632 [#allocation4]
                  %s635 = scalar_lea.vmem %s617, %s633
                $region98: #{_forward_impl.2} parent=85 // loop_footer
                  %s621 = sadd.s32 %s619, 1
                $region99: #{_forward_impl.2} parent=85 // loop_footer_branch
                  %618 = sbr.rel target = $region95
                $region100: #{_forward_impl.2} parent=85 // loop_exit
                  _
              $region86: #{_forward_impl.2} parent=63 // pred_fallthru
                _
              // Predicated region
              $region101: #{_forward_impl.2} parent=63 // pred_check
                _
              $region102: #{_forward_impl.2} parent=63 // pred_check_branch
                %637 = sbr.rel target = $region104
              $region103: #{_forward_impl.2} parent=63 // pred_region
                _
              $region104: #{_forward_impl.2} parent=63 // pred_fallthru
                _
            $region64: #{_forward_impl.2} parent=59 // pred_fallthru
              _
            // Predicated region
            $region65: #{_forward_impl.2} parent=59 // pred_check
              _
            $region66: #{_forward_impl.2} parent=59 // pred_check_branch
              %539 = sbr.rel target = $region68
            $region67: #{_forward_impl.2} parent=59 // pred_region
              %s541 = ssub.s32 256, 1
              %s542 = sshrl.u32 %s528, 1
              // While loop
              $region69: #{_forward_impl.2} parent=67 // loop_pre_header
                _
              $region70: #{_forward_impl.2} parent=67 // loop_header
                %s544 = sphi 0, %s546
                %p545 = scmp.ge.s32.totalorder %s544, %s542
                %s549 = sphi 0, %s558
                %s550 = sphi %s521, %s561
                %s551 = sphi %s532, %s562
              $region71: #{_forward_impl.2} parent=67 // loop_header_branch
                %548 = sbr.rel (%p545) target = $region75
              $region72: #{_forward_impl.2} parent=67 // loop_body
                %v552 = vld [vmem:[%s550] sm:%s541]
                %553 = vst [vmem:[%s551] sm:%s541] %v552
                %v554 = vld [vmem:[%s550 + $0x8] sm:%s541]
                %555 = vst [vmem:[%s551 + $0x8] sm:%s541] %v554
                %s556 = sadd.s32 1, %s549
                %p557 = scmp.ge.s32.totalorder %s556, %s542
                %s558 = scalar_select %p557, 0, %s556
                %s559 = smul.u32 %s558, 16
                %s560 = smul.u32 %s558, 16
                %s561 = scalar_lea.vmem %s521, %s559 [#allocation4]
                %s562 = scalar_lea.vmem %s532, %s560
              $region73: #{_forward_impl.2} parent=67 // loop_footer
                %s546 = sadd.s32 %s544, 1
              $region74: #{_forward_impl.2} parent=67 // loop_footer_branch
                %543 = sbr.rel target = $region70
              $region75: #{_forward_impl.2} parent=67 // loop_exit
                _
              %s563 = sshrl.u32 %s528, 1
              %s564 = sand.u32 %s528, 1
              %s565 = smul.u32 %s563, 2
              %s566 = smul.u32 8, %s565
              %s567 = scalar_lea.vmem %s521, %s566 [#allocation4]
              %s568 = smul.u32 8, %s565
              %s569 = scalar_lea.vmem %s532, %s568
              // While loop
              $region76: #{_forward_impl.2} parent=67 // loop_pre_header
                _
              $region77: #{_forward_impl.2} parent=67 // loop_header
                %s571 = sphi 0, %s573
                %p572 = scmp.ge.s32.totalorder %s571, %s564
                %s576 = sphi 0, %s583
                %s577 = sphi %s567, %s586
                %s578 = sphi %s569, %s587
              $region78: #{_forward_impl.2} parent=67 // loop_header_branch
                %575 = sbr.rel (%p572) target = $region82
              $region79: #{_forward_impl.2} parent=67 // loop_body
                %v579 = vld [vmem:[%s577] sm:%s541]
                %580 = vst [vmem:[%s578] sm:%s541] %v579
                %s581 = sadd.s32 1, %s576
                %p582 = scmp.ge.s32.totalorder %s581, %s564
                %s583 = scalar_select %p582, 0, %s581
                %s584 = smul.u32 %s583, 8
                %s585 = smul.u32 %s583, 8
                %s586 = scalar_lea.vmem %s567, %s584 [#allocation4]
                %s587 = scalar_lea.vmem %s569, %s585
              $region80: #{_forward_impl.2} parent=67 // loop_footer
                %s573 = sadd.s32 %s571, 1
              $region81: #{_forward_impl.2} parent=67 // loop_footer_branch
                %570 = sbr.rel target = $region77
              $region82: #{_forward_impl.2} parent=67 // loop_exit
                _
            $region68: #{_forward_impl.2} parent=59 // pred_fallthru
              _
          $region60: #{_forward_impl.2} parent=55 // pred_fallthru
            _
          %638 = vnop
        $region56: #{_forward_impl.2} parent=47 // pred_fallthru
          _
      $region48: #{_forward_impl.2} parent=5 // pred_fallthru
        _
      %p639 = scmp.le.s32.totalorder 2, %s14
      // Predicated region
      $region105: #{_forward_impl.2} parent=5 // pred_check
        %p640 = pneg %p639
      $region106: #{_forward_impl.2} parent=5 // pred_check_branch
        %642 = sbr.rel (%p640) target = $region108
      $region107: #{_forward_impl.2} parent=5 // pred_region
        %s643 = ssub.s32 %s14, 2
        // Predicated region
        $region109: #{_forward_impl.2} parent=107 // pred_check
          %p644 = pneg %p195
        $region110: #{_forward_impl.2} parent=107 // pred_check_branch
          %646 = sbr.rel (%p644) target = $region112
        $region111: #{_forward_impl.2} parent=107 // pred_region
          %s647 = sand.u32 %s180, 1
          %s648 = sand.u32 %s180, 1
          %s649 = smul.addr %s648, 16
          %s650 = scalar_lea.vmem [#allocation4], %s649
        $region112: #{_forward_impl.2} parent=107 // pred_fallthru
          _
      $region108: #{_forward_impl.2} parent=5 // pred_fallthru
        _
    $region6: #{_forward_impl.2} parent=1 // loop_footer
      %s18 = sadd.s32 1, %s14
    $region7: #{_forward_impl.2} parent=1 // loop_footer_branch
      %13 = sbr.rel target = $region3
    $region8: #{_forward_impl.2} parent=1 // loop_exit
      _
    %651 = vsyncpa [#allocation3], 1
    %s652 = scalar_lea.sflag [#allocation3], 1
    %653 = vsyncpa %s652, 1

// kernel: _forward_impl.3
$region0: #{_forward_impl.3}
  #allocation0 [shape = 'u32[]', space=smem, size = 0x4, offset = 0x4, fixed_abs, tag = 'smem constant byte address 0x4 - core index']
  #allocation1 [shape = 'u32[72,128]{1,0:T(1,128)}', space=vmem, size = 0x9000, scoped, tag = 'internal scratch']
  %s0 = inlined_call_operand.vmem [shape: f32[8,280], index: 0, kind: input, shape index: {}]
  %s1 = inlined_call_operand.hbm [shape: bf16[280,384], index: 1, kind: input, shape index: {}]
  %s2 = inlined_call_operand.vmem [shape: f32[1,384], index: 2, kind: input, shape index: {}]
  %s3 = inlined_call_operand.vmem [shape: bf16[256,128], index: 3, kind: input, shape index: {}]
  %s4 = inlined_call_operand.vmem [shape: f32[1,128], index: 4, kind: input, shape index: {}]
  %s5 = inlined_call_operand.vmem [shape: f32[1,128], index: 5, kind: input, shape index: {}]
  %s6 = inlined_call_operand.vmem [shape: f32[1,128], index: 6, kind: input, shape index: {}]
  %s7 = inlined_call_operand.vmem [shape: bf16[128,256], index: 7, kind: input, shape index: {}]
  %s8 = inlined_call_operand.vmem [shape: f32[1,256], index: 8, kind: input, shape index: {}]
  %s9 = inlined_call_operand.hbm [shape: bf16[128,128], index: 9, kind: input, shape index: {}]
  %s10 = inlined_call_operand.vmem [shape: f32[1,128], index: 10, kind: input, shape index: {}]
  %s11 = inlined_call_operand.vmem [shape: f32[1,128], index: 11, kind: input, shape index: {}]
  %s12 = inlined_call_operand.hbm [shape: f32[1,128], index: 12, kind: input, shape index: {}]
  %s13 = inlined_call_operand.vmem [shape: f32[8,128], index: 13, kind: output, shape index: {}]
  %s14 = sld [smem:[#allocation0]]
  $region74: #{_forward_impl.3} parent=0
    _
  %s16 = ssub.s32 1, %s14
  %s17 = scalar_select 0, %s16, %s14
  $region1: #{_forward_impl.3} parent=0
    #allocation2 [shape = 'u8[215040]{0}', space=vmem, size = 0x34800, scoped, tag = 'input window, operand 1, single buffered']
    #allocation3 [shape = 's32[1]{0}', space=sflag, size = 0x4, scoped, tag = 'scoped memory for _forward_impl.3']
    #allocation4 [shape = 'u8[32768]{0}', space=vmem, size = 0x8000, scoped, tag = 'input window, operand 9, single buffered']
    #allocation5 [shape = 's32[1]{0}', space=sflag, size = 0x4, scoped, tag = 'scoped memory for _forward_impl.3']
    #allocation6 [shape = 'u8[512]{0}', space=vmem, size = 0x400, scoped, tag = 'input window, operand 12, single buffered']
    %18 = vsyncpa [#allocation3], 0
    %19 = vsyncpa [#allocation5], 0
    // Predicated region
    $region2: #{_forward_impl.3} parent=1 // pred_check
      _
    $region3: #{_forward_impl.3} parent=1 // pred_check_branch
      %21 = sbr.rel (0) target = $region5
    $region4: #{_forward_impl.3} parent=1 // pred_region
      _
    $region5: #{_forward_impl.3} parent=1 // pred_fallthru
      _
    // Predicated region
    $region6: #{_forward_impl.3} parent=1 // pred_check
      _
    $region7: #{_forward_impl.3} parent=1 // pred_check_branch
      %23 = sbr.rel (0) target = $region9
    $region8: #{_forward_impl.3} parent=1 // pred_region
      %25 = vsyncadd [#allocation3], 0
      %s26 = sshll.u32 %s1, 4
      %s27 = int_to_ptr.hbm [resolvable:$true] %s26
      %s28 = sshll.u32 [#allocation2], 4
      %s29 = int_to_ptr.vmem [resolvable:$true] %s28
      %34 = dma.hbm_to_vmem [thread:$0]  %s27, 6720, %s29, [#allocation3], 192, 192, 12
    $region9: #{_forward_impl.3} parent=1 // pred_fallthru
      _
    // Predicated region
    $region10: #{_forward_impl.3} parent=1 // pred_check
      _
    $region11: #{_forward_impl.3} parent=1 // pred_check_branch
      %36 = sbr.rel (0) target = $region13
    $region12: #{_forward_impl.3} parent=1 // pred_region
      _
    $region13: #{_forward_impl.3} parent=1 // pred_fallthru
      _
    // Predicated region
    $region14: #{_forward_impl.3} parent=1 // pred_check
      _
    $region15: #{_forward_impl.3} parent=1 // pred_check_branch
      %38 = sbr.rel (0) target = $region17
    $region16: #{_forward_impl.3} parent=1 // pred_region
      _
    $region17: #{_forward_impl.3} parent=1 // pred_fallthru
      _
    // Predicated region
    $region18: #{_forward_impl.3} parent=1 // pred_check
      _
    $region19: #{_forward_impl.3} parent=1 // pred_check_branch
      %40 = sbr.rel (0) target = $region21
    $region20: #{_forward_impl.3} parent=1 // pred_region
      _
    $region21: #{_forward_impl.3} parent=1 // pred_fallthru
      _
    // Predicated region
    $region22: #{_forward_impl.3} parent=1 // pred_check
      _
    $region23: #{_forward_impl.3} parent=1 // pred_check_branch
      %42 = sbr.rel (0) target = $region25
    $region24: #{_forward_impl.3} parent=1 // pred_region
      _
    $region25: #{_forward_impl.3} parent=1 // pred_fallthru
      _
    // Predicated region
    $region26: #{_forward_impl.3} parent=1 // pred_check
      _
    $region27: #{_forward_impl.3} parent=1 // pred_check_branch
      %44 = sbr.rel (0) target = $region29
    $region28: #{_forward_impl.3} parent=1 // pred_region
      _
    $region29: #{_forward_impl.3} parent=1 // pred_fallthru
      _
    // Predicated region
    $region30: #{_forward_impl.3} parent=1 // pred_check
      _
    $region31: #{_forward_impl.3} parent=1 // pred_check_branch
      %46 = sbr.rel (0) target = $region33
    $region32: #{_forward_impl.3} parent=1 // pred_region
      _
    $region33: #{_forward_impl.3} parent=1 // pred_fallthru
      _
    // Predicated region
    $region34: #{_forward_impl.3} parent=1 // pred_check
      _
    $region35: #{_forward_impl.3} parent=1 // pred_check_branch
      %48 = sbr.rel (0) target = $region37
    $region36: #{_forward_impl.3} parent=1 // pred_region
      _
    $region37: #{_forward_impl.3} parent=1 // pred_fallthru
      _
    // Predicated region
    $region38: #{_forward_impl.3} parent=1 // pred_check
      _
    $region39: #{_forward_impl.3} parent=1 // pred_check_branch
      %50 = sbr.rel (0) target = $region41
    $region40: #{_forward_impl.3} parent=1 // pred_region
      %52 = vsyncadd [#allocation5], 0
      %s53 = sshll.u32 %s9, 4
      %s54 = int_to_ptr.hbm [resolvable:$true] %s53
      %s55 = sshll.u32 [#allocation4], 4
      %s56 = int_to_ptr.vmem [resolvable:$true] %s55
      %61 = dma.hbm_to_vmem [thread:$0]  %s54, 1024, %s56, [#allocation5], 64, 64, 4
    $region41: #{_forward_impl.3} parent=1 // pred_fallthru
      _
    // Predicated region
    $region42: #{_forward_impl.3} parent=1 // pred_check
      _
    $region43: #{_forward_impl.3} parent=1 // pred_check_branch
      %63 = sbr.rel (0) target = $region45
    $region44: #{_forward_impl.3} parent=1 // pred_region
      _
    $region45: #{_forward_impl.3} parent=1 // pred_fallthru
      _
    // Predicated region
    $region46: #{_forward_impl.3} parent=1 // pred_check
      _
    $region47: #{_forward_impl.3} parent=1 // pred_check_branch
      %65 = sbr.rel (0) target = $region49
    $region48: #{_forward_impl.3} parent=1 // pred_region
      _
    $region49: #{_forward_impl.3} parent=1 // pred_fallthru
      _
    // Predicated region
    $region50: #{_forward_impl.3} parent=1 // pred_check
      _
    $region51: #{_forward_impl.3} parent=1 // pred_check_branch
      %67 = sbr.rel (0) target = $region53
    $region52: #{_forward_impl.3} parent=1 // pred_region
      %69 = vsyncadd [#allocation5], 0
      %s71 = sshll.u32 %s12, 4
      %s72 = int_to_ptr.hbm [resolvable:$true] %s71
      %s73 = sshll.u32 [#allocation6], 4
      %s74 = int_to_ptr.vmem [resolvable:$true] %s73
      %76 = dma.hbm_to_vmem [thread:$0]  %s72, 16, %s74, [#allocation5]
    $region53: #{_forward_impl.3} parent=1 // pred_fallthru
      _
    // Predicated region
    $region54: #{_forward_impl.3} parent=1 // pred_check
      _
    $region55: #{_forward_impl.3} parent=1 // pred_check_branch
      %78 = sbr.rel (0) target = $region57
    $region56: #{_forward_impl.3} parent=1 // pred_region
      %80 = dma.done [#allocation3], 6720
    $region57: #{_forward_impl.3} parent=1 // pred_fallthru
      _
    // Predicated region
    $region58: #{_forward_impl.3} parent=1 // pred_check
      _
    $region59: #{_forward_impl.3} parent=1 // pred_check_branch
      %82 = sbr.rel (0) target = $region61
    $region60: #{_forward_impl.3} parent=1 // pred_region
      %84 = dma.done [#allocation5], 1024
    $region61: #{_forward_impl.3} parent=1 // pred_fallthru
      _
    // Predicated region
    $region62: #{_forward_impl.3} parent=1 // pred_check
      _
    $region63: #{_forward_impl.3} parent=1 // pred_check_branch
      %86 = sbr.rel (0) target = $region65
    $region64: #{_forward_impl.3} parent=1 // pred_region
      %88 = dma.done [#allocation5], 16
    $region65: #{_forward_impl.3} parent=1 // pred_fallthru
      _
    %v90 = vld [vmem:[%s0] sm:$0xff]
    %v91 = vld [vmem:[%s0 + $0x8] sm:$0xff]
    %v92 = vld [vmem:[%s0 + $0x10] sm:$0xff]
    %v93 = vpack.c.bf16 %v90, %v90
    %v94 = vpack.c.bf16 %v91, %v91
    %v95 = vpack.c.bf16 %v92, %v92
    %v96 = vld [vmem:[#allocation2] sm:$0xff]
    %v97 = vld [vmem:[#allocation2 + $0x8] sm:$0xf]
    %v98 = vld [vmem:[#allocation2 + $0xc] sm:$0xff]
    %v99 = vld [vmem:[#allocation2 + $0x14] sm:$0xf]
    %v100 = vld [vmem:[#allocation2 + $0x18] sm:$0xff]
    %v101 = vld [vmem:[#allocation2 + $0x20] sm:$0xf]
    %v102 = vld [vmem:[#allocation2 + $0x24] sm:$0xff]
    %v103 = vld [vmem:[#allocation2 + $0x2c] sm:$0xf]
    %v104 = vld [vmem:[#allocation2 + $0x30] sm:$0xff]
    %v105 = vld [vmem:[#allocation2 + $0x38] sm:$0xf]
    %v106 = vld [vmem:[#allocation2 + $0x3c] sm:$0xff]
    %v107 = vld [vmem:[#allocation2 + $0x44] sm:$0xf]
    %v108 = vld [vmem:[#allocation2 + $0x48] sm:$0xff]
    %v109 = vld [vmem:[#allocation2 + $0x50] sm:$0xf]
    %v110 = vld [vmem:[#allocation2 + $0x54] sm:$0xff]
    %v111 = vld [vmem:[#allocation2 + $0x5c] sm:$0xf]
    %v112 = vld [vmem:[#allocation2 + $0x60] sm:$0xff]
    %v113 = vld [vmem:[#allocation2 + $0x68] sm:$0xf]
    %v114 = vld [vmem:[#allocation2 + $0x6c] sm:$0xff]
    %v115 = vld [vmem:[#allocation2 + $0x74] sm:$0xf]
    %v116 = vld [vmem:[#allocation2 + $0x78] sm:$0xff]
    %v117 = vld [vmem:[#allocation2 + $0x80] sm:$0xf]
    %v118 = vld [vmem:[#allocation2 + $0x84] sm:$0xff]
    %v119 = vld [vmem:[#allocation2 + $0x8c] sm:$0xf]
    %v120 = vld [vmem:[#allocation2 + $0x90] sm:$0xff]
    %v121 = vld [vmem:[#allocation2 + $0x98] sm:$0xf]
    %v122 = vld [vmem:[#allocation2 + $0x9c] sm:$0xff]
    %v123 = vld [vmem:[#allocation2 + $0xa4] sm:$0xf]
    %v124 = vld [vmem:[#allocation2 + $0xa8] sm:$0xff]
    %v125 = vld [vmem:[#allocation2 + $0xb0] sm:$0xf]
    %v126 = vld [vmem:[#allocation2 + $0xb4] sm:$0xff]
    %v127 = vld [vmem:[#allocation2 + $0xbc] sm:$0xf]
    %v128 = vld [vmem:[#allocation2 + $0xc0] sm:$0xff]
    %v129 = vld [vmem:[#allocation2 + $0xc8] sm:$0xf]
    %v130 = vld [vmem:[#allocation2 + $0xcc] sm:$0xff]
    %v131 = vld [vmem:[#allocation2 + $0xd4] sm:$0xf]
    %v132 = vld [vmem:[#allocation2 + $0xd8] sm:$0xff]
    %v133 = vld [vmem:[#allocation2 + $0xe0] sm:$0xf]
    %v134 = vld [vmem:[#allocation2 + $0xe4] sm:$0xff]
    %v135 = vld [vmem:[#allocation2 + $0xec] sm:$0xf]
    %v136 = vld [vmem:[#allocation2 + $0xf0] sm:$0xff]
    %v137 = vld [vmem:[#allocation2 + $0xf8] sm:$0xf]
    %v138 = vld [vmem:[#allocation2 + $0xfc] sm:$0xff]
    %v139 = vld [vmem:[#allocation2 + $0x104] sm:$0xf]
    %v140 = vld [vmem:[#allocation2 + $0x108] sm:$0xff]
    %v141 = vld [vmem:[#allocation2 + $0x110] sm:$0xf]
    %v142 = vld [vmem:[#allocation2 + $0x114] sm:$0xff]
    %v143 = vld [vmem:[#allocation2 + $0x11c] sm:$0xf]
    %v144 = vld [vmem:[#allocation2 + $0x120] sm:$0xff]
    %v145 = vld [vmem:[#allocation2 + $0x128] sm:$0xf]
    %v146 = vld [vmem:[#allocation2 + $0x12c] sm:$0xff]
    %v147 = vld [vmem:[#allocation2 + $0x134] sm:$0xf]
    %v148 = vld [vmem:[#allocation2 + $0x138] sm:$0xff]
    %v149 = vld [vmem:[#allocation2 + $0x140] sm:$0xf]
    %v150 = vld [vmem:[#allocation2 + $0x144] sm:$0xff]
    %v151 = vld [vmem:[#allocation2 + $0x14c] sm:$0xf]
    %v152 = vld [vmem:[#allocation2 + $0x150] sm:$0xff]
    %v153 = vld [vmem:[#allocation2 + $0x158] sm:$0xf]
    %v154 = vld [vmem:[#allocation2 + $0x15c] sm:$0xff]
    %v155 = vld [vmem:[#allocation2 + $0x164] sm:$0xf]
    %v156 = vld [vmem:[#allocation2 + $0x168] sm:$0xff]
    %v157 = vld [vmem:[#allocation2 + $0x170] sm:$0xf]
    %v158 = vld [vmem:[#allocation2 + $0x174] sm:$0xff]
    %v159 = vld [vmem:[#allocation2 + $0x17c] sm:$0xf]
    %v160 = vld [vmem:[#allocation2 + $0x180] sm:$0xff]
    %v161 = vld [vmem:[#allocation2 + $0x188] sm:$0xf]
    %v162 = vld [vmem:[#allocation2 + $0x18c] sm:$0xff]
    %v163 = vld [vmem:[#allocation2 + $0x194] sm:$0xf]
    %v164 = vld [vmem:[#allocation2 + $0x198] sm:$0xff]
    %v165 = vld [vmem:[#allocation2 + $0x1a0] sm:$0xf]
    %v166 = vld [vmem:[%s2] sm:$0x7]
    %v168 = vperm.slane %v166, 0
    %v169 = vperm.slane %v166, 1
    %v170 = vperm.slane %v166, 2
    %v244 = vunpack.c.l.b16 %v96
    %v245 = vunpack.c.h.b16 %v96
    %v246 = vunpack.c.l.b16 %v97
    %v247 = vunpack.c.l.b16 %v98
    %v248 = vunpack.c.h.b16 %v98
    %v249 = vunpack.c.l.b16 %v99
    %v250 = vunpack.c.l.b16 %v100
    %v251 = vunpack.c.h.b16 %v100
    %v252 = vunpack.c.l.b16 %v101
    %v253 = vunpack.c.l.b16 %v102
    %v254 = vunpack.c.h.b16 %v102
    %v255 = vunpack.c.l.b16 %v103
    %v256 = vunpack.c.l.b16 %v104
    %v257 = vunpack.c.h.b16 %v104
    %v258 = vunpack.c.l.b16 %v105
    %v259 = vunpack.c.l.b16 %v106
    %v260 = vunpack.c.h.b16 %v106
    %v261 = vunpack.c.l.b16 %v107
    %v262 = vunpack.c.l.b16 %v108
    %v263 = vunpack.c.h.b16 %v108
    %v264 = vunpack.c.l.b16 %v109
    %v265 = vunpack.c.l.b16 %v110
    %v266 = vunpack.c.h.b16 %v110
    %v267 = vunpack.c.l.b16 %v111
    %v268 = vunpack.c.l.b16 %v112
    %v269 = vunpack.c.h.b16 %v112
    %v270 = vunpack.c.l.b16 %v113
    %v271 = vunpack.c.l.b16 %v114
    %v272 = vunpack.c.h.b16 %v114
    %v273 = vunpack.c.l.b16 %v115
    %v274 = vunpack.c.l.b16 %v116
    %v275 = vunpack.c.h.b16 %v116
    %v276 = vunpack.c.l.b16 %v117
    %v277 = vunpack.c.l.b16 %v118
    %v278 = vunpack.c.h.b16 %v118
    %v279 = vunpack.c.l.b16 %v119
    %v280 = vunpack.c.l.b16 %v120
    %v281 = vunpack.c.h.b16 %v120
    %v282 = vunpack.c.l.b16 %v121
    %v283 = vunpack.c.l.b16 %v122
    %v284 = vunpack.c.h.b16 %v122
    %v285 = vunpack.c.l.b16 %v123
    %v286 = vunpack.c.l.b16 %v124
    %v287 = vunpack.c.h.b16 %v124
    %v288 = vunpack.c.l.b16 %v125
    %v289 = vunpack.c.l.b16 %v126
    %v290 = vunpack.c.h.b16 %v126
    %v291 = vunpack.c.l.b16 %v127
    %v292 = vunpack.c.l.b16 %v128
    %v293 = vunpack.c.h.b16 %v128
    %v294 = vunpack.c.l.b16 %v129
    %v295 = vunpack.c.l.b16 %v130
    %v296 = vunpack.c.h.b16 %v130
    %v297 = vunpack.c.l.b16 %v131
    %v298 = vunpack.c.l.b16 %v132
    %v299 = vunpack.c.h.b16 %v132
    %v300 = vunpack.c.l.b16 %v133
    %v301 = vunpack.c.l.b16 %v134
    %v302 = vunpack.c.h.b16 %v134
    %v303 = vunpack.c.l.b16 %v135
    %v304 = vunpack.c.l.b16 %v136
    %v305 = vunpack.c.h.b16 %v136
    %v306 = vunpack.c.l.b16 %v137
    %v307 = vunpack.c.l.b16 %v138
    %v308 = vunpack.c.h.b16 %v138
    %v309 = vunpack.c.l.b16 %v139
    %v310 = vunpack.c.l.b16 %v140
    %v311 = vunpack.c.h.b16 %v140
    %v312 = vunpack.c.l.b16 %v141
    %v313 = vunpack.c.l.b16 %v142
    %v314 = vunpack.c.h.b16 %v142
    %v315 = vunpack.c.l.b16 %v143
    %v316 = vunpack.c.l.b16 %v144
    %v317 = vunpack.c.h.b16 %v144
    %v318 = vunpack.c.l.b16 %v145
    %v319 = vunpack.c.l.b16 %v146
    %v320 = vunpack.c.h.b16 %v146
    %v321 = vunpack.c.l.b16 %v147
    %v322 = vunpack.c.l.b16 %v148
    %v323 = vunpack.c.h.b16 %v148
    %v324 = vunpack.c.l.b16 %v149
    %v325 = vunpack.c.l.b16 %v150
    %v326 = vunpack.c.h.b16 %v150
    %v327 = vunpack.c.l.b16 %v151
    %v328 = vunpack.c.l.b16 %v152
    %v329 = vunpack.c.h.b16 %v152
    %v330 = vunpack.c.l.b16 %v153
    %v331 = vunpack.c.l.b16 %v154
    %v332 = vunpack.c.h.b16 %v154
    %v333 = vunpack.c.l.b16 %v155
    %v334 = vunpack.c.l.b16 %v156
    %v335 = vunpack.c.h.b16 %v156
    %v336 = vunpack.c.l.b16 %v157
    %v337 = vunpack.c.l.b16 %v158
    %v338 = vunpack.c.h.b16 %v158
    %v339 = vunpack.c.l.b16 %v159
    %v340 = vunpack.c.l.b16 %v160
    %v341 = vunpack.c.h.b16 %v160
    %v342 = vunpack.c.l.b16 %v161
    %v343 = vunpack.c.l.b16 %v162
    %v344 = vunpack.c.h.b16 %v162
    %v345 = vunpack.c.l.b16 %v163
    %v346 = vunpack.c.l.b16 %v164
    %v347 = vunpack.c.h.b16 %v164
    %v348 = vunpack.c.l.b16 %v165
    %v349 = vpack.c.b16 %v247, %v244
    %v350 = vpack.c.b16 %v248, %v245
    %v351 = vpack.c.b16 %v249, %v246
    %v352 = vpack.c.b16 %v253, %v250
    %v353 = vpack.c.b16 %v254, %v251
    %v354 = vpack.c.b16 %v255, %v252
    %v355 = vpack.c.b16 %v259, %v256
    %v356 = vpack.c.b16 %v260, %v257
    %v357 = vpack.c.b16 %v261, %v258
    %v358 = vpack.c.b16 %v265, %v262
    %v359 = vpack.c.b16 %v266, %v263
    %v360 = vpack.c.b16 %v267, %v264
    %v361 = vpack.c.b16 %v271, %v268
    %v362 = vpack.c.b16 %v272, %v269
    %v363 = vpack.c.b16 %v273, %v270
    %v364 = vpack.c.b16 %v277, %v274
    %v365 = vpack.c.b16 %v278, %v275
    %v366 = vpack.c.b16 %v279, %v276
    %v367 = vpack.c.b16 %v283, %v280
    %v368 = vpack.c.b16 %v284, %v281
    %v369 = vpack.c.b16 %v285, %v282
    %v370 = vpack.c.b16 %v289, %v286
    %v371 = vpack.c.b16 %v290, %v287
    %v372 = vpack.c.b16 %v291, %v288
    %v373 = vpack.c.b16 %v295, %v292
    %v374 = vpack.c.b16 %v296, %v293
    %v375 = vpack.c.b16 %v297, %v294
    %v376 = vpack.c.b16 %v301, %v298
    %v377 = vpack.c.b16 %v302, %v299
    %v378 = vpack.c.b16 %v303, %v300
    %v379 = vpack.c.b16 %v307, %v304
    %v380 = vpack.c.b16 %v308, %v305
    %v381 = vpack.c.b16 %v309, %v306
    %v382 = vpack.c.b16 %v313, %v310
    %v383 = vpack.c.b16 %v314, %v311
    %v384 = vpack.c.b16 %v315, %v312
    %v385 = vpack.c.b16 %v319, %v316
    %v386 = vpack.c.b16 %v320, %v317
    %v387 = vpack.c.b16 %v321, %v318
    %v388 = vpack.c.b16 %v325, %v322
    %v389 = vpack.c.b16 %v326, %v323
    %v390 = vpack.c.b16 %v327, %v324
    %v391 = vpack.c.b16 %v331, %v328
    %v392 = vpack.c.b16 %v332, %v329
    %v393 = vpack.c.b16 %v333, %v330
    %v394 = vpack.c.b16 %v337, %v334
    %v395 = vpack.c.b16 %v338, %v335
    %v396 = vpack.c.b16 %v339, %v336
    %v397 = vpack.c.b16 %v343, %v340
    %v398 = vpack.c.b16 %v344, %v341
    %v399 = vpack.c.b16 %v345, %v342
    %v400 = vpack.c.b16 %v346, %v346
    %v401 = vpack.c.b16 %v347, %v347
    %v402 = vpack.c.b16 %v348, %v348
    %vm454 = vcmask 195584
    %v456 = vsel %vm454, %v95, 0
    %vm458 = vcmask 1043456
    %v460 = vsel %vm458, %v400, 0
    %v463 = vsel %vm458, %v401, 0
    %v466 = vsel %vm458, %v402, 0
    %468 = vmatpush.bf16.msra.mxu0 %v370
    %469 = vmatpush.bf16.msra.mxu0 %v367
    %470 = vmatpush.bf16.msra.mxu0 %v364
    %471 = vmatpush.bf16.msra.mxu0 %v361
    %472 = vmatpush.bf16.msra.mxu0 %v358
    %473 = vmatpush.bf16.msra.mxu0 %v355
    %474 = vmatpush.bf16.msra.mxu0 %v352
    %475 = vmatpush.bf16.msra.mxu0 %v349
    %476 = vmatmul.bf16.gmra.mxu0 %v93
    %v477 = vpop.f32.mrf.mxu0
    %v478 = vadd.f32 %v168, %v477
    %v479 = vpop.f32.mrf.mxu0
    %480 = vdwg.mxu0
    %481 = vmatpush.bf16.msra.mxu0 %v394
    %482 = vmatpush.bf16.msra.mxu0 %v391
    %483 = vmatpush.bf16.msra.mxu0 %v388
    %484 = vmatpush.bf16.msra.mxu0 %v385
    %485 = vmatpush.bf16.msra.mxu0 %v382
    %486 = vmatpush.bf16.msra.mxu0 %v379
    %487 = vmatpush.bf16.msra.mxu0 %v376
    %488 = vmatpush.bf16.msra.mxu0 %v373
    %489 = vmatmul.bf16.gmra.mxu0 %v94
    %v490 = vpop.f32.mrf.mxu0
    %v491 = vadd.f32 %v478, %v490
    %v492 = vpop.f32.mrf.mxu0
    %493 = vdwg.mxu0
    %494 = vmatpush.bf16.msra.mxu0 0
    %495 = vmatpush.bf16.msra.mxu0 0
    %496 = vmatpush.bf16.msra.mxu0 0
    %497 = vmatpush.bf16.msra.mxu0 0
    %498 = vmatpush.bf16.msra.mxu0 0
    %499 = vmatpush.bf16.msra.mxu0 0
    %500 = vmatpush.bf16.msra.mxu0 %v460
    %501 = vmatpush.bf16.msra.mxu0 %v397
    %502 = vmatmul.bf16.gmra.mxu0 %v456
    %v503 = vpop.f32.mrf.mxu0
    %v504 = vadd.f32 %v491, %v503
    %v505 = vpop.f32.mrf.mxu0
    %506 = vdwg.mxu0
    %507 = vmatpush.bf16.msra.mxu0 %v371
    %508 = vmatpush.bf16.msra.mxu0 %v368
    %509 = vmatpush.bf16.msra.mxu0 %v365
    %510 = vmatpush.bf16.msra.mxu0 %v362
    %511 = vmatpush.bf16.msra.mxu0 %v359
    %512 = vmatpush.bf16.msra.mxu0 %v356
    %513 = vmatpush.bf16.msra.mxu0 %v353
    %514 = vmatpush.bf16.msra.mxu0 %v350
    %515 = vmatmul.bf16.gmra.mxu0 %v93
    %v516 = vpop.f32.mrf.mxu0
    %v517 = vadd.f32 %v169, %v516
    %v518 = vpop.f32.mrf.mxu0
    %519 = vdwg.mxu0
    %520 = vmatpush.bf16.msra.mxu0 %v395
    %521 = vmatpush.bf16.msra.mxu0 %v392
    %522 = vmatpush.bf16.msra.mxu0 %v389
    %523 = vmatpush.bf16.msra.mxu0 %v386
    %524 = vmatpush.bf16.msra.mxu0 %v383
    %525 = vmatpush.bf16.msra.mxu0 %v380
    %526 = vmatpush.bf16.msra.mxu0 %v377
    %527 = vmatpush.bf16.msra.mxu0 %v374
    %528 = vmatmul.bf16.gmra.mxu0 %v94
    %v529 = vpop.f32.mrf.mxu0
    %v530 = vadd.f32 %v517, %v529
    %v531 = vpop.f32.mrf.mxu0
    %532 = vdwg.mxu0
    %533 = vmatpush.bf16.msra.mxu0 0
    %534 = vmatpush.bf16.msra.mxu0 0
    %535 = vmatpush.bf16.msra.mxu0 0
    %536 = vmatpush.bf16.msra.mxu0 0
    %537 = vmatpush.bf16.msra.mxu0 0
    %538 = vmatpush.bf16.msra.mxu0 0
    %539 = vmatpush.bf16.msra.mxu0 %v463
    %540 = vmatpush.bf16.msra.mxu0 %v398
    %541 = vmatmul.bf16.gmra.mxu0 %v456
    %v542 = vpop.f32.mrf.mxu0
    %v543 = vadd.f32 %v530, %v542
    %v544 = vpop.f32.mrf.mxu0
    %545 = vdwg.mxu0
    %546 = vmatpush.bf16.msra.mxu0 %v372
    %547 = vmatpush.bf16.msra.mxu0 %v369
    %548 = vmatpush.bf16.msra.mxu0 %v366
    %549 = vmatpush.bf16.msra.mxu0 %v363
    %550 = vmatpush.bf16.msra.mxu0 %v360
    %551 = vmatpush.bf16.msra.mxu0 %v357
    %552 = vmatpush.bf16.msra.mxu0 %v354
    %553 = vmatpush.bf16.msra.mxu0 %v351
    %554 = vmatmul.bf16.gmra.mxu0 %v93
    %v555 = vpop.f32.mrf.mxu0
    %v556 = vadd.f32 %v170, %v555
    %v557 = vpop.f32.mrf.mxu0
    %558 = vdwg.mxu0
    %559 = vmatpush.bf16.msra.mxu0 %v396
    %560 = vmatpush.bf16.msra.mxu0 %v393
    %561 = vmatpush.bf16.msra.mxu0 %v390
    %562 = vmatpush.bf16.msra.mxu0 %v387
    %563 = vmatpush.bf16.msra.mxu0 %v384
    %564 = vmatpush.bf16.msra.mxu0 %v381
    %565 = vmatpush.bf16.msra.mxu0 %v378
    %566 = vmatpush.bf16.msra.mxu0 %v375
    %567 = vmatmul.bf16.gmra.mxu0 %v94
    %v568 = vpop.f32.mrf.mxu0
    %v569 = vadd.f32 %v556, %v568
    %v570 = vpop.f32.mrf.mxu0
    %571 = vdwg.mxu0
    %572 = vmatpush.bf16.msra.mxu0 0
    %573 = vmatpush.bf16.msra.mxu0 0
    %574 = vmatpush.bf16.msra.mxu0 0
    %575 = vmatpush.bf16.msra.mxu0 0
    %576 = vmatpush.bf16.msra.mxu0 0
    %577 = vmatpush.bf16.msra.mxu0 0
    %578 = vmatpush.bf16.msra.mxu0 %v466
    %579 = vmatpush.bf16.msra.mxu0 %v399
    %580 = vmatmul.bf16.gmra.mxu0 %v456
    %v581 = vpop.f32.mrf.mxu0
    %v582 = vadd.f32 %v569, %v581
    %v583 = vpop.f32.mrf.mxu0
    %584 = vdwg.mxu0
    %v585 = vmax.f32 %v504, 0.0
    %v586 = vmax.f32 %v543, 0.0
    %v587 = vpack.c.bf16 %v585, %v585
    %v588 = vpack.c.bf16 %v586, %v586
    %v589 = vld [vmem:[%s3] sm:$0xf]
    %v590 = vld [vmem:[%s3 + $0x4] sm:$0xf]
    %v591 = vld [vmem:[%s3 + $0x8] sm:$0xf]
    %v592 = vld [vmem:[%s3 + $0xc] sm:$0xf]
    %v593 = vld [vmem:[%s3 + $0x10] sm:$0xf]
    %v594 = vld [vmem:[%s3 + $0x14] sm:$0xf]
    %v595 = vld [vmem:[%s3 + $0x18] sm:$0xf]
    %v596 = vld [vmem:[%s3 + $0x1c] sm:$0xf]
    %v597 = vld [vmem:[%s3 + $0x20] sm:$0xf]
    %v598 = vld [vmem:[%s3 + $0x24] sm:$0xf]
    %v599 = vld [vmem:[%s3 + $0x28] sm:$0xf]
    %v600 = vld [vmem:[%s3 + $0x2c] sm:$0xf]
    %v601 = vld [vmem:[%s3 + $0x30] sm:$0xf]
    %v602 = vld [vmem:[%s3 + $0x34] sm:$0xf]
    %v603 = vld [vmem:[%s3 + $0x38] sm:$0xf]
    %v604 = vld [vmem:[%s3 + $0x3c] sm:$0xf]
    %v605 = vld [vmem:[%s3 + $0x40] sm:$0xf]
    %v606 = vld [vmem:[%s3 + $0x44] sm:$0xf]
    %v607 = vld [vmem:[%s3 + $0x48] sm:$0xf]
    %v608 = vld [vmem:[%s3 + $0x4c] sm:$0xf]
    %v609 = vld [vmem:[%s3 + $0x50] sm:$0xf]
    %v610 = vld [vmem:[%s3 + $0x54] sm:$0xf]
    %v611 = vld [vmem:[%s3 + $0x58] sm:$0xf]
    %v612 = vld [vmem:[%s3 + $0x5c] sm:$0xf]
    %v613 = vld [vmem:[%s3 + $0x60] sm:$0xf]
    %v614 = vld [vmem:[%s3 + $0x64] sm:$0xf]
    %v615 = vld [vmem:[%s3 + $0x68] sm:$0xf]
    %v616 = vld [vmem:[%s3 + $0x6c] sm:$0xf]
    %v617 = vld [vmem:[%s3 + $0x70] sm:$0xf]
    %v618 = vld [vmem:[%s3 + $0x74] sm:$0xf]
    %v619 = vld [vmem:[%s3 + $0x78] sm:$0xf]
    %v620 = vld [vmem:[%s3 + $0x7c] sm:$0xf]
    %v621 = vld [vmem:[%s4] sm:$0x1]
    %v623 = vperm.slane %v621, 0
    %v657 = vunpack.c.l.b16 %v589
    %v658 = vunpack.c.l.b16 %v590
    %v659 = vunpack.c.l.b16 %v591
    %v660 = vunpack.c.l.b16 %v592
    %v661 = vunpack.c.l.b16 %v593
    %v662 = vunpack.c.l.b16 %v594
    %v663 = vunpack.c.l.b16 %v595
    %v664 = vunpack.c.l.b16 %v596
    %v665 = vunpack.c.l.b16 %v597
    %v666 = vunpack.c.l.b16 %v598
    %v667 = vunpack.c.l.b16 %v599
    %v668 = vunpack.c.l.b16 %v600
    %v669 = vunpack.c.l.b16 %v601
    %v670 = vunpack.c.l.b16 %v602
    %v671 = vunpack.c.l.b16 %v603
    %v672 = vunpack.c.l.b16 %v604
    %v673 = vunpack.c.l.b16 %v605
    %v674 = vunpack.c.l.b16 %v606
    %v675 = vunpack.c.l.b16 %v607
    %v676 = vunpack.c.l.b16 %v608
    %v677 = vunpack.c.l.b16 %v609
    %v678 = vunpack.c.l.b16 %v610
    %v679 = vunpack.c.l.b16 %v611
    %v680 = vunpack.c.l.b16 %v612
    %v681 = vunpack.c.l.b16 %v613
    %v682 = vunpack.c.l.b16 %v614
    %v683 = vunpack.c.l.b16 %v615
    %v684 = vunpack.c.l.b16 %v616
    %v685 = vunpack.c.l.b16 %v617
    %v686 = vunpack.c.l.b16 %v618
    %v687 = vunpack.c.l.b16 %v619
    %v688 = vunpack.c.l.b16 %v620
    %v689 = vpack.c.b16 %v658, %v657
    %v690 = vpack.c.b16 %v660, %v659
    %v691 = vpack.c.b16 %v662, %v661
    %v692 = vpack.c.b16 %v664, %v663
    %v693 = vpack.c.b16 %v666, %v665
    %v694 = vpack.c.b16 %v668, %v667
    %v695 = vpack.c.b16 %v670, %v669
    %v696 = vpack.c.b16 %v672, %v671
    %v697 = vpack.c.b16 %v674, %v673
    %v698 = vpack.c.b16 %v676, %v675
    %v699 = vpack.c.b16 %v678, %v677
    %v700 = vpack.c.b16 %v680, %v679
    %v701 = vpack.c.b16 %v682, %v681
    %v702 = vpack.c.b16 %v684, %v683
    %v703 = vpack.c.b16 %v686, %v685
    %v704 = vpack.c.b16 %v688, %v687
    %721 = vmatpush.bf16.msra.mxu0 %v696
    %722 = vmatpush.bf16.msra.mxu0 %v695
    %723 = vmatpush.bf16.msra.mxu0 %v694
    %724 = vmatpush.bf16.msra.mxu0 %v693
    %725 = vmatpush.bf16.msra.mxu0 %v692
    %726 = vmatpush.bf16.msra.mxu0 %v691
    %727 = vmatpush.bf16.msra.mxu0 %v690
    %728 = vmatpush.bf16.msra.mxu0 %v689
    %729 = vmatmul.bf16.gmra.mxu0 %v587
    %v730 = vpop.f32.mrf.mxu0
    %v731 = vadd.f32 %v623, %v730
    %v732 = vpop.f32.mrf.mxu0
    %733 = vdwg.mxu0
    %734 = vmatpush.bf16.msra.mxu0 %v704
    %735 = vmatpush.bf16.msra.mxu0 %v703
    %736 = vmatpush.bf16.msra.mxu0 %v702
    %737 = vmatpush.bf16.msra.mxu0 %v701
    %738 = vmatpush.bf16.msra.mxu0 %v700
    %739 = vmatpush.bf16.msra.mxu0 %v699
    %740 = vmatpush.bf16.msra.mxu0 %v698
    %741 = vmatpush.bf16.msra.mxu0 %v697
    %742 = vmatmul.bf16.gmra.mxu0 %v588
    %v743 = vpop.f32.mrf.mxu0
    %v744 = vadd.f32 %v731, %v743
    %v745 = vpop.f32.mrf.mxu0
    %746 = vdwg.mxu0
    %v747 = vadd.f32 %v744, %v582
    %748 = vadd.xlane.f32.xlu0 %v747
    %v749 = vpop.xlane.xlu0 %748
    %v750 = vmul.f32 %v749, 0.015625
    %v751 = vmul.f32 %v747, %v747
    %752 = vadd.xlane.f32.xlu0 %v751
    %v753 = vpop.xlane.xlu0 %752
    %v754 = vmul.f32 %v753, 0.015625
    %v755 = vmul.f32 %v750, %v750
    %v756 = vsub.f32 %v754, %v755
    %v757 = vmax.f32 %v756, 0.0
    %v758 = vsub.f32 %v747, %v750
    %v759 = vadd.f32 %v757, 1e-05
    %v760 = vrsqrt.pop %v759
    %v761 = vmul.f32 %v760, %v759
    %v762 = vmul.f32 %v761, %v760
    %v763 = vmul.f32 0.5, %v762
    %v764 = vsub.f32 1.5, %v763
    %v765 = vmul.f32 %v760, %v764
    %vm766 = vweird.f32 %v759
    %vm767 = vweird.f32 %v760
    %vm768 = vmor %vm766, %vm767
    %v769 = vsel %vm768, %v760, %v765
    %v770 = vld [vmem:[%s5] sm:$0x1]
    %v772 = vperm.slane %v770, 0
    %v774 = vmul.f32 %v769, %v772
    %v775 = vmul.f32 %v758, %v774
    %v776 = vld [vmem:[%s6] sm:$0x1]
    %v778 = vperm.slane %v776, 0
    %v780 = vadd.f32 %v775, %v778
    %v781 = vpack.c.bf16 %v780, %v780
    %v782 = vld [vmem:[%s7] sm:$0xff]
    %v783 = vld [vmem:[%s7 + $0x8] sm:$0xff]
    %v784 = vld [vmem:[%s7 + $0x10] sm:$0xff]
    %v785 = vld [vmem:[%s7 + $0x18] sm:$0xff]
    %v786 = vld [vmem:[%s7 + $0x20] sm:$0xff]
    %v787 = vld [vmem:[%s7 + $0x28] sm:$0xff]
    %v788 = vld [vmem:[%s7 + $0x30] sm:$0xff]
    %v789 = vld [vmem:[%s7 + $0x38] sm:$0xff]
    %v790 = vld [vmem:[%s7 + $0x40] sm:$0xff]
    %v791 = vld [vmem:[%s7 + $0x48] sm:$0xff]
    %v792 = vld [vmem:[%s7 + $0x50] sm:$0xff]
    %v793 = vld [vmem:[%s7 + $0x58] sm:$0xff]
    %v794 = vld [vmem:[%s7 + $0x60] sm:$0xff]
    %v795 = vld [vmem:[%s7 + $0x68] sm:$0xff]
    %v796 = vld [vmem:[%s7 + $0x70] sm:$0xff]
    %v797 = vld [vmem:[%s7 + $0x78] sm:$0xff]
    %v798 = vld [vmem:[%s8] sm:$0x3]
    %v800 = vperm.slane %v798, 0
    %v801 = vperm.slane %v798, 1
    %v820 = vunpack.c.l.b16 %v782
    %v821 = vunpack.c.h.b16 %v782
    %v822 = vunpack.c.l.b16 %v783
    %v823 = vunpack.c.h.b16 %v783
    %v824 = vunpack.c.l.b16 %v784
    %v825 = vunpack.c.h.b16 %v784
    %v826 = vunpack.c.l.b16 %v785
    %v827 = vunpack.c.h.b16 %v785
    %v828 = vunpack.c.l.b16 %v786
    %v829 = vunpack.c.h.b16 %v786
    %v830 = vunpack.c.l.b16 %v787
    %v831 = vunpack.c.h.b16 %v787
    %v832 = vunpack.c.l.b16 %v788
    %v833 = vunpack.c.h.b16 %v788
    %v834 = vunpack.c.l.b16 %v789
    %v835 = vunpack.c.h.b16 %v789
    %v836 = vunpack.c.l.b16 %v790
    %v837 = vunpack.c.h.b16 %v790
    %v838 = vunpack.c.l.b16 %v791
    %v839 = vunpack.c.h.b16 %v791
    %v840 = vunpack.c.l.b16 %v792
    %v841 = vunpack.c.h.b16 %v792
    %v842 = vunpack.c.l.b16 %v793
    %v843 = vunpack.c.h.b16 %v793
    %v844 = vunpack.c.l.b16 %v794
    %v845 = vunpack.c.h.b16 %v794
    %v846 = vunpack.c.l.b16 %v795
    %v847 = vunpack.c.h.b16 %v795
    %v848 = vunpack.c.l.b16 %v796
    %v849 = vunpack.c.h.b16 %v796
    %v850 = vunpack.c.l.b16 %v797
    %v851 = vunpack.c.h.b16 %v797
    %v852 = vpack.c.b16 %v822, %v820
    %v853 = vpack.c.b16 %v823, %v821
    %v854 = vpack.c.b16 %v826, %v824
    %v855 = vpack.c.b16 %v827, %v825
    %v856 = vpack.c.b16 %v830, %v828
    %v857 = vpack.c.b16 %v831, %v829
    %v858 = vpack.c.b16 %v834, %v832
    %v859 = vpack.c.b16 %v835, %v833
    %v860 = vpack.c.b16 %v838, %v836
    %v861 = vpack.c.b16 %v839, %v837
    %v862 = vpack.c.b16 %v842, %v840
    %v863 = vpack.c.b16 %v843, %v841
    %v864 = vpack.c.b16 %v846, %v844
    %v865 = vpack.c.b16 %v847, %v845
    %v866 = vpack.c.b16 %v850, %v848
    %v867 = vpack.c.b16 %v851, %v849
    %884 = vmatpush.bf16.msra.mxu0 %v866
    %885 = vmatpush.bf16.msra.mxu0 %v864
    %886 = vmatpush.bf16.msra.mxu0 %v862
    %887 = vmatpush.bf16.msra.mxu0 %v860
    %888 = vmatpush.bf16.msra.mxu0 %v858
    %889 = vmatpush.bf16.msra.mxu0 %v856
    %890 = vmatpush.bf16.msra.mxu0 %v854
    %891 = vmatpush.bf16.msra.mxu0 %v852
    %892 = vmatmul.bf16.gmra.mxu0 %v781
    %v893 = vpop.f32.mrf.mxu0
    %v894 = vadd.f32 %v800, %v893
    %v895 = vpop.f32.mrf.mxu0
    %896 = vdwg.mxu0
    %897 = vmatpush.bf16.msra.mxu0 %v867
    %898 = vmatpush.bf16.msra.mxu0 %v865
    %899 = vmatpush.bf16.msra.mxu0 %v863
    %900 = vmatpush.bf16.msra.mxu0 %v861
    %901 = vmatpush.bf16.msra.mxu0 %v859
    %902 = vmatpush.bf16.msra.mxu0 %v857
    %903 = vmatpush.bf16.msra.mxu0 %v855
    %904 = vmatpush.bf16.msra.mxu0 %v853
    %905 = vmatmul.bf16.gmra.mxu0 %v781
    %v906 = vpop.f32.mrf.mxu0
    %v907 = vadd.f32 %v801, %v906
    %v908 = vpop.f32.mrf.mxu0
    %909 = vdwg.mxu0
    %v910 = vmax.f32 %v894, 0.0
    %v911 = vpack.c.bf16 %v910, %v910
    %v912 = vld [vmem:[#allocation4] sm:$0xf]
    %v913 = vld [vmem:[#allocation4 + $0x4] sm:$0xf]
    %v914 = vld [vmem:[#allocation4 + $0x8] sm:$0xf]
    %v915 = vld [vmem:[#allocation4 + $0xc] sm:$0xf]
    %v916 = vld [vmem:[#allocation4 + $0x10] sm:$0xf]
    %v917 = vld [vmem:[#allocation4 + $0x14] sm:$0xf]
    %v918 = vld [vmem:[#allocation4 + $0x18] sm:$0xf]
    %v919 = vld [vmem:[#allocation4 + $0x1c] sm:$0xf]
    %v920 = vld [vmem:[#allocation4 + $0x20] sm:$0xf]
    %v921 = vld [vmem:[#allocation4 + $0x24] sm:$0xf]
    %v922 = vld [vmem:[#allocation4 + $0x28] sm:$0xf]
    %v923 = vld [vmem:[#allocation4 + $0x2c] sm:$0xf]
    %v924 = vld [vmem:[#allocation4 + $0x30] sm:$0xf]
    %v925 = vld [vmem:[#allocation4 + $0x34] sm:$0xf]
    %v926 = vld [vmem:[#allocation4 + $0x38] sm:$0xf]
    %v927 = vld [vmem:[#allocation4 + $0x3c] sm:$0xf]
    %v928 = vld [vmem:[%s10] sm:$0x1]
    %v930 = vperm.slane %v928, 0
    %v948 = vunpack.c.l.b16 %v912
    %v949 = vunpack.c.l.b16 %v913
    %v950 = vunpack.c.l.b16 %v914
    %v951 = vunpack.c.l.b16 %v915
    %v952 = vunpack.c.l.b16 %v916
    %v953 = vunpack.c.l.b16 %v917
    %v954 = vunpack.c.l.b16 %v918
    %v955 = vunpack.c.l.b16 %v919
    %v956 = vunpack.c.l.b16 %v920
    %v957 = vunpack.c.l.b16 %v921
    %v958 = vunpack.c.l.b16 %v922
    %v959 = vunpack.c.l.b16 %v923
    %v960 = vunpack.c.l.b16 %v924
    %v961 = vunpack.c.l.b16 %v925
    %v962 = vunpack.c.l.b16 %v926
    %v963 = vunpack.c.l.b16 %v927
    %v964 = vpack.c.b16 %v949, %v948
    %v965 = vpack.c.b16 %v951, %v950
    %v966 = vpack.c.b16 %v953, %v952
    %v967 = vpack.c.b16 %v955, %v954
    %v968 = vpack.c.b16 %v957, %v956
    %v969 = vpack.c.b16 %v959, %v958
    %v970 = vpack.c.b16 %v961, %v960
    %v971 = vpack.c.b16 %v963, %v962
    %980 = vmatpush.bf16.msra.mxu0 %v971
    %981 = vmatpush.bf16.msra.mxu0 %v970
    %982 = vmatpush.bf16.msra.mxu0 %v969
    %983 = vmatpush.bf16.msra.mxu0 %v968
    %984 = vmatpush.bf16.msra.mxu0 %v967
    %985 = vmatpush.bf16.msra.mxu0 %v966
    %986 = vmatpush.bf16.msra.mxu0 %v965
    %987 = vmatpush.bf16.msra.mxu0 %v964
    %988 = vmatmul.bf16.gmra.mxu0 %v911
    %v989 = vpop.f32.mrf.mxu0
    %v990 = vadd.f32 %v930, %v989
    %v991 = vpop.f32.mrf.mxu0
    %992 = vdwg.mxu0
    %v993 = vadd.f32 %v990, %v907
    %994 = vadd.xlane.f32.xlu0 %v993
    %v995 = vpop.xlane.xlu0 %994
    %v996 = vmul.f32 %v995, 0.03125
    %v997 = vmul.f32 %v993, %v993
    %998 = vadd.xlane.f32.xlu0 %v997
    %v999 = vpop.xlane.xlu0 %998
    %v1000 = vmul.f32 %v999, 0.03125
    %v1001 = vmul.f32 %v996, %v996
    %v1002 = vsub.f32 %v1000, %v1001
    %v1003 = vmax.f32 %v1002, 0.0
    %v1004 = vsub.f32 %v993, %v996
    %v1005 = vadd.f32 %v1003, 1e-05
    %v1006 = vrsqrt.pop %v1005
    %v1007 = vmul.f32 %v1006, %v1005
    %v1008 = vmul.f32 %v1007, %v1006
    %v1009 = vmul.f32 0.5, %v1008
    %v1010 = vsub.f32 1.5, %v1009
    %v1011 = vmul.f32 %v1006, %v1010
    %vm1012 = vweird.f32 %v1005
    %vm1013 = vweird.f32 %v1006
    %vm1014 = vmor %vm1012, %vm1013
    %v1015 = vsel %vm1014, %v1006, %v1011
    %v1016 = vld [vmem:[%s11] sm:$0x1]
    %v1018 = vperm.slane %v1016, 0
    %v1020 = vmul.f32 %v1015, %v1018
    %v1021 = vmul.f32 %v1004, %v1020
    %v1022 = vld [vmem:[#allocation6] sm:$0x1]
    %v1024 = vperm.slane %v1022, 0
    %v1026 = vadd.f32 %v1021, %v1024
    %1027 = vst [vmem:[%s13] sm:$0xff] %v1026
    // Predicated region
    $region66: #{_forward_impl.3} parent=1 // pred_check
      _
    $region67: #{_forward_impl.3} parent=1 // pred_check_branch
      %1029 = sbr.rel (0) target = $region69
    $region68: #{_forward_impl.3} parent=1 // pred_region
      _
    $region69: #{_forward_impl.3} parent=1 // pred_fallthru
      _
    // Predicated region
    $region70: #{_forward_impl.3} parent=1 // pred_check
      _
    $region71: #{_forward_impl.3} parent=1 // pred_check_branch
      %1031 = sbr.rel (0) target = $region73
    $region72: #{_forward_impl.3} parent=1 // pred_region
      _
    $region73: #{_forward_impl.3} parent=1 // pred_fallthru
      _
    %1032 = vsyncpa [#allocation3], 1
    %1033 = vsyncpa [#allocation5], 1

</llo_original>
